<compile_context>
chip_gen: v5e
topology: v5e:2x2
jax: 0.10.0
libtpu: 0.0.40
codegen_flags: <defaults>
</compile_context>

<pallas_src>
import functools

import jax
import jax.numpy as jnp
from jax.experimental import pallas as pl
from jax.experimental.pallas import tpu as pltpu


# --------------------------------------------------------------------------
# Fused kernel: one batch element per grid step, layout (C, S_pad), S = D*H*W
# --------------------------------------------------------------------------
def _block_encoder_kernel(x_ref, m_ref, w0_ref, b0_ref, w1_ref, b1_ref,
                          sw1_ref, sb1_ref, sw2_ref, sb2_ref, o_ref,
                          *, d, h, w, cdtype, with_se, residual, padded):
    eps = 1e-5
    hw = h * w
    s_real = d * h * w
    s_pad = x_ref.shape[-1]
    inv_s = 1.0 / float(s_real)

    # Precomputed 0/1 boundary masks, rows: d_lo, d_hi, h_lo, h_hi, w_lo, w_hi
    # (+ "valid" row when S was lane-padded). Loaded once, pipeline-resident.
    dmask = {-1: m_ref[pl.ds(0, 1), :], 1: m_ref[pl.ds(1, 1), :]}
    hmask = {-1: m_ref[pl.ds(2, 1), :], 1: m_ref[pl.ds(3, 1), :]}
    wmask = {-1: m_ref[pl.ds(4, 1), :], 1: m_ref[pl.ds(5, 1), :]}
    valid = m_ref[pl.ds(6, 1), :] if padded else None

    def shifted(a, off):
        """a[:, (j + off) mod S_pad] for every destination column j (XLU roll)."""
        if off == 0:
            return a
        return pltpu.roll(a, (-off) % s_pad, 1)

    def inorm_silu(act):
        """InstanceNorm3d (affine=False, eps=1e-5) + SiLU on a (C, S_pad) f32
        slab whose padded columns are zero. Returns f32 (zero on pad cols)."""
        mu = jnp.sum(act, axis=1, keepdims=True) * inv_s
        xc = act - mu
        if padded:
            xc = xc * valid                    # keep pad columns exactly zero
        var = jnp.sum(xc * xc, axis=1, keepdims=True) * inv_s
        y = xc * jax.lax.rsqrt(var + eps)
        return y * jax.nn.sigmoid(y)

    def conv3x3x3(act_f32, w_r, b_r):
        """3x3x3 'same' conv via 3 MXU matmuls (one per kd, K = 9*Cin).
        act_f32: (Cin, S_pad) f32, zero on pad columns. Returns (Cout,S_pad) f32.
        Taps are built with hierarchical pltpu.roll + per-axis 0/1 masks."""
        cin = act_f32.shape[0]
        # Sublane concatenation of packed (sub-32-bit) operands needs
        # Cin % 16 == 0; otherwise keep the im2col pieces in f32 and cast the
        # concatenated slab right before the MXU.
        col_dt = cdtype if (cin % 16 == 0
                            or jnp.dtype(cdtype).itemsize >= 4) else jnp.float32
        act = act_f32.astype(col_dt)
        acc = None
        for kd_idx, od in enumerate((-1, 0, 1)):
            dsl = act if od == 0 else shifted(act, od * hw) * dmask[od]
            cols = []
            for oh in (-1, 0, 1):
                hsl = dsl if oh == 0 else shifted(dsl, oh * w) * hmask[oh]
                for ow in (-1, 0, 1):
                    wsl = hsl if ow == 0 else shifted(hsl, ow) * wmask[ow]
                    cols.append(wsl)
            slab = jnp.concatenate(cols, axis=0).astype(cdtype)   # (9*Cin, S_pad)
            part = jnp.dot(w_r[kd_idx], slab,                     # (Cout, 9*Cin)@
                           preferred_element_type=jnp.float32)    # -> (Cout,S_pad)
            acc = part if acc is None else acc + part
        out = acc + b_r[...].astype(jnp.float32)                  # (Cout,1) bcast
        if padded:
            out = out * valid            # keep bias off the padded columns
        return out

    # ---- forward ----------------------------------------------------------
    out = conv3x3x3(inorm_silu(x_ref[0].astype(jnp.float32)), w0_ref, b0_ref)
    out = conv3x3x3(inorm_silu(out), w1_ref, b1_ref)

    if with_se:
        # TODO(synk): SEBlock3D internals assumed (GAP -> FC(C->C/4) -> ReLU ->
        # FC(C/4->C) -> sigmoid -> scale); verify against the real module.
        pooled = jnp.sum(out, axis=1, keepdims=True) * inv_s           # (C, 1)
        hid = jnp.sum(sw1_ref[...] * pooled, axis=0, keepdims=True)    # (1, C/4)
        hid = jnp.maximum(hid + sb1_ref[...], 0.0)
        gate = jnp.sum(sw2_ref[...] * hid, axis=1, keepdims=True)      # (C, 1)
        out = out * jax.nn.sigmoid(gate + sb2_ref[...])

    if residual:
        out = out + x_ref[0].astype(jnp.float32)    # re-read VMEM-resident input

    o_ref[0] = out.astype(o_ref.dtype)


# --------------------------------------------------------------------------
# Wrapper helpers
# --------------------------------------------------------------------------
def _vmem_limit_bytes():
    """Generation-aware scoped-VMEM limit (~3/4 of physical, clamped 32..96 MiB)."""
    try:
        cap = getattr(pltpu.get_tpu_info(), "vmem_capacity_bytes", None)
    except Exception:
        cap = None
    if not cap:
        cap = 64 * 1024 * 1024            # conservative fallback (v7x physical)
    return int(min(96 << 20, max(32 << 20, (3 * cap) // 4)))


def _boundary_masks(d, h, w, s_pad, dtype):
    """(6|7, S_pad) 0/1 masks: per-axis tap validity (+ lane-pad validity)."""
    s = d * h * w
    di = jnp.arange(d, dtype=jnp.int32).reshape(d, 1, 1)
    hi = jnp.arange(h, dtype=jnp.int32).reshape(1, h, 1)
    wi = jnp.arange(w, dtype=jnp.int32).reshape(1, 1, w)
    rows = [di >= 1, di <= d - 2, hi >= 1, hi <= h - 2, wi >= 1, wi <= w - 2]
    m = jnp.stack([jnp.broadcast_to(r, (d, h, w)).reshape(s) for r in rows])
    m = m.astype(dtype)
    if s_pad != s:
        m = jnp.pad(m, ((0, 0), (0, s_pad - s)))            # masks are 0 on pad
        valid = (jnp.arange(s_pad) < s).astype(dtype).reshape(1, s_pad)
        m = jnp.concatenate([m, valid], axis=0)
    return m


# --------------------------------------------------------------------------
# Wrapper: free NCDHW -> (B, C, S) reshape, lane padding, weight repacking
# --------------------------------------------------------------------------
def block_encoder_forward(x, params, *, compute_dtype=jnp.bfloat16,
                          with_se=True, residual=True):
    """x: (B, C_in, D, H, W) NCDHW (PyTorch layout). Returns same layout."""
    b, c, d, h, w = x.shape
    s = d * h * w
    s_pad = ((s + 127) // 128) * 128          # lane-dense stores / elementwise
    co = params["w0"].shape[-1]
    cr = params["se_w1"].shape[-1]
    if residual:
        assert co == c, "residual add requires in_channels == n_channels"

    x_flat = x.reshape(b, c, s)               # free: NCDHW is channel-major
    if s_pad != s:
        x_flat = jnp.pad(x_flat, ((0, 0), (0, 0), (0, s_pad - s)))

    masks = _boundary_masks(d, h, w, s_pad, compute_dtype)
    n_mrows = masks.shape[0]

    # conv weights -> (kd, Cout, 9*Cin), inner columns ordered (kh, kw, ci)
    w0 = jnp.transpose(params["w0"], (0, 4, 1, 2, 3)).reshape(3, co, 9 * c)
    w1 = jnp.transpose(params["w1"], (0, 4, 1, 2, 3)).reshape(3, co, 9 * co)
    w0 = w0.astype(compute_dtype)
    w1 = w1.astype(compute_dtype)
    b0 = params["b0"].reshape(co, 1).astype(jnp.float32)
    b1 = params["b1"].reshape(co, 1).astype(jnp.float32)
    sw1 = params["se_w1"].astype(jnp.float32)                      # (C, C/4)
    sb1 = params["se_b1"].reshape(1, cr).astype(jnp.float32)
    sw2 = jnp.transpose(params["se_w2"]).astype(jnp.float32)       # (C, C/4)
    sb2 = params["se_b2"].reshape(co, 1).astype(jnp.float32)

    kernel = functools.partial(
        _block_encoder_kernel, d=d, h=h, w=w, cdtype=compute_dtype,
        with_se=with_se, residual=residual, padded=(s_pad != s))

    out_flat = pl.pallas_call(
        kernel,
        out_shape=jax.ShapeDtypeStruct((b, co, s_pad), x.dtype),
        grid=(b,),
        in_specs=[
            pl.BlockSpec((1, c, s_pad), lambda i: (i, 0, 0)),
            pl.BlockSpec((n_mrows, s_pad), lambda i: (0, 0)),
            pl.BlockSpec((3, co, 9 * c), lambda i: (0, 0, 0)),
            pl.BlockSpec((co, 1), lambda i: (0, 0)),
            pl.BlockSpec((3, co, 9 * co), lambda i: (0, 0, 0)),
            pl.BlockSpec((co, 1), lambda i: (0, 0)),
            pl.BlockSpec((co, cr), lambda i: (0, 0)),
            pl.BlockSpec((1, cr), lambda i: (0, 0)),
            pl.BlockSpec((co, cr), lambda i: (0, 0)),
            pl.BlockSpec((co, 1), lambda i: (0, 0)),
        ],
        out_specs=pl.BlockSpec((1, co, s_pad), lambda i: (i, 0, 0)),
        compiler_params=pltpu.CompilerParams(
            dimension_semantics=("parallel",),        # batch axis -> megacore
            vmem_limit_bytes=_vmem_limit_bytes()),
    )(x_flat, masks, w0, b0, w1, b1, sw1, sb1, sw2, sb2)

    out = out_flat if s_pad == s else out_flat[:, :, :s]
    return out.reshape(b, co, d, h, w)


# --------------------------------------------------------------------------
# Pure-JAX reference (correctness check only), NCDHW throughout
# --------------------------------------------------------------------------
def reference_block_encoder(x, params):
    def inorm(v):
        m = jnp.mean(v, axis=(2, 3, 4), keepdims=True)
        var = jnp.mean((v - m) ** 2, axis=(2, 3, 4), keepdims=True)
        return (v - m) * jax.lax.rsqrt(var + 1e-5)

    def silu(v):
        return v * jax.nn.sigmoid(v)

    def conv(v, wgt, bias):
        out = jax.lax.conv_general_dilated(
            v, wgt, window_strides=(1, 1, 1), padding="SAME",
            dimension_numbers=("NCDHW", "DHWIO", "NCDHW"))
        return out + bias.reshape(1, -1, 1, 1, 1)

    out = conv(silu(inorm(x)), params["w0"], params["b0"])
    out = conv(silu(inorm(out)), params["w1"], params["b1"])
    pooled = jnp.mean(out, axis=(2, 3, 4))                        # (B, C)
    hid = jnp.maximum(pooled @ params["se_w1"] + params["se_b1"], 0.0)
    scale = jax.nn.sigmoid(hid @ params["se_w2"] + params["se_b2"])
    return out * scale[:, :, None, None, None] + x


# --------------------------------------------------------------------------
if __name__ == "__main__":
    B, C, D, H, W = 2, 8, 4, 6, 8        # S = 192 -> lane-padded to 256
    CR = C // 4                          # SE reduction_ratio = 4

    key = jax.random.PRNGKey(0)
    ks = jax.random.split(key, 9)
    x = jax.random.normal(ks[0], (B, C, D, H, W), jnp.float32)

    params = {
        # conv weights stored DHWIO (kd, kh, kw, Cin, Cout)
        "w0": 0.1 * jax.random.normal(ks[1], (3, 3, 3, C, C), jnp.float32),
        "b0": 0.1 * jax.random.normal(ks[2], (C,), jnp.float32),
        "w1": 0.1 * jax.random.normal(ks[3], (3, 3, 3, C, C), jnp.float32),
        "b1": 0.1 * jax.random.normal(ks[4], (C,), jnp.float32),
        "se_w1": 0.2 * jax.random.normal(ks[5], (C, CR), jnp.float32),
        "se_b1": 0.1 * jax.random.normal(ks[6], (CR,), jnp.float32),
        "se_w2": 0.2 * jax.random.normal(ks[7], (CR, C), jnp.float32),
        "se_b2": 0.1 * jax.random.normal(ks[8], (C,), jnp.float32),
    }

    ref = reference_block_encoder(x, params)

    # Fast path: bf16 MXU operands, f32 stats/accumulation, f32 I/O.
    out_bf16 = jax.block_until_ready(block_encoder_forward(x, params))
    assert out_bf16.shape == x.shape, (out_bf16.shape, x.shape)
    err_bf16 = float(jnp.max(jnp.abs(out_bf16 - ref)))
    assert err_bf16 < 5e-2, f"bf16-compute max abs err {err_bf16}"

    # Full-f32 path: tight parity with the XLA reference.
    out_f32 = jax.block_until_ready(
        block_encoder_forward(x, params, compute_dtype=jnp.float32))
    err_f32 = float(jnp.max(jnp.abs(out_f32 - ref)))
    assert err_f32 < 2e-3, f"f32-path max abs err {err_f32}"

    # bf16 activations at the HBM boundary (halves the volume read + write).
    out_b16io = jax.block_until_ready(
        block_encoder_forward(x.astype(jnp.bfloat16), params))
    err_b16io = float(jnp.max(jnp.abs(out_b16io.astype(jnp.float32) - ref)))
    assert err_b16io < 2.5e-1, f"bf16-I/O max abs err {err_b16io}"

    print("KERNEL_OK")
</pallas_src>

<mosaic_0001>
module attributes {stable_mosaic.version = 11 : i64} {
  func.func @_block_encoder_kernel(%arg0: i32, %arg1: memref<1x8x256xf32, #tpu.memory_space<vmem>>, %arg2: memref<7x256xbf16, #tpu.memory_space<vmem>>, %arg3: memref<3x8x72xbf16, #tpu.memory_space<vmem>>, %arg4: memref<8x1xf32, #tpu.memory_space<vmem>>, %arg5: memref<3x8x72xbf16, #tpu.memory_space<vmem>>, %arg6: memref<8x1xf32, #tpu.memory_space<vmem>>, %arg7: memref<8x2xf32, #tpu.memory_space<vmem>>, %arg8: memref<1x2xf32, #tpu.memory_space<vmem>>, %arg9: memref<8x2xf32, #tpu.memory_space<vmem>>, %arg10: memref<8x1xf32, #tpu.memory_space<vmem>>, %arg11: memref<1x8x256xf32, #tpu.memory_space<vmem>>) attributes {dimension_semantics = [#tpu.dimension_semantics<parallel>], iteration_bounds = array<i64: 2>, scalar_prefetch = 0 : i64, scratch_operands = 0 : i64, tpu.core_type = #tpu.core_type<tc>, window_params = [{transform_indices = @transform_0, window_bounds = array<i64: 1, 8, 256>}, {pipeline_mode = #tpu.pipeline_mode<synchronous>, transform_indices = @transform_1, window_bounds = array<i64: 7, 256>}, {pipeline_mode = #tpu.pipeline_mode<synchronous>, transform_indices = @transform_2, window_bounds = array<i64: 3, 8, 72>}, {pipeline_mode = #tpu.pipeline_mode<synchronous>, transform_indices = @transform_3, window_bounds = array<i64: 8, 1>}, {pipeline_mode = #tpu.pipeline_mode<synchronous>, transform_indices = @transform_4, window_bounds = array<i64: 3, 8, 72>}, {pipeline_mode = #tpu.pipeline_mode<synchronous>, transform_indices = @transform_5, window_bounds = array<i64: 8, 1>}, {pipeline_mode = #tpu.pipeline_mode<synchronous>, transform_indices = @transform_6, window_bounds = array<i64: 8, 2>}, {pipeline_mode = #tpu.pipeline_mode<synchronous>, transform_indices = @transform_7, window_bounds = array<i64: 1, 2>}, {pipeline_mode = #tpu.pipeline_mode<synchronous>, transform_indices = @transform_8, window_bounds = array<i64: 8, 2>}, {pipeline_mode = #tpu.pipeline_mode<synchronous>, transform_indices = @transform_9, window_bounds = array<i64: 8, 1>}, {transform_indices = @transform_10, window_bounds = array<i64: 1, 8, 256>}]} {
    %c0 = arith.constant 0 : index
    %c0_0 = arith.constant 0 : index
    %0 = vector.load %arg2[%c0, %c0_0] : memref<7x256xbf16, #tpu.memory_space<vmem>>, vector<1x256xbf16>
    %c1 = arith.constant 1 : index
    %c0_1 = arith.constant 0 : index
    %1 = vector.load %arg2[%c1, %c0_1] : memref<7x256xbf16, #tpu.memory_space<vmem>>, vector<1x256xbf16>
    %c2 = arith.constant 2 : index
    %c0_2 = arith.constant 0 : index
    %2 = vector.load %arg2[%c2, %c0_2] : memref<7x256xbf16, #tpu.memory_space<vmem>>, vector<1x256xbf16>
    %c3 = arith.constant 3 : index
    %c0_3 = arith.constant 0 : index
    %3 = vector.load %arg2[%c3, %c0_3] : memref<7x256xbf16, #tpu.memory_space<vmem>>, vector<1x256xbf16>
    %c4 = arith.constant 4 : index
    %c0_4 = arith.constant 0 : index
    %4 = vector.load %arg2[%c4, %c0_4] : memref<7x256xbf16, #tpu.memory_space<vmem>>, vector<1x256xbf16>
    %c5 = arith.constant 5 : index
    %c0_5 = arith.constant 0 : index
    %5 = vector.load %arg2[%c5, %c0_5] : memref<7x256xbf16, #tpu.memory_space<vmem>>, vector<1x256xbf16>
    %c6 = arith.constant 6 : index
    %c0_6 = arith.constant 0 : index
    %6 = vector.load %arg2[%c6, %c0_6] : memref<7x256xbf16, #tpu.memory_space<vmem>>, vector<1x256xbf16>
    %c0_7 = arith.constant 0 : index
    %c0_8 = arith.constant 0 : index
    %c0_9 = arith.constant 0 : index
    %7 = vector.load %arg1[%c0_7, %c0_8, %c0_9] : memref<1x8x256xf32, #tpu.memory_space<vmem>>, vector<1x8x256xf32>
    %8 = vector.shape_cast %7 : vector<1x8x256xf32> to vector<8x256xf32>
    %cst = arith.constant dense<0.000000e+00> : vector<8xf32>
    %9 = vector.multi_reduction <add>, %8, %cst [1] : vector<8x256xf32> to vector<8xf32>
    %10 = vector.shape_cast %9 : vector<8xf32> to vector<8x1xf32>
    %cst_10 = arith.constant 0.00520833349 : f32
    %11 = vector.broadcast %cst_10 : f32 to vector<8x1xf32>
    %12 = arith.mulf %10, %11 : vector<8x1xf32>
    %13 = vector.broadcast %12 : vector<8x1xf32> to vector<8x256xf32>
    %14 = arith.subf %8, %13 : vector<8x256xf32>
    %15 = arith.extf %6 : vector<1x256xbf16> to vector<1x256xf32>
    %16 = vector.broadcast %15 : vector<1x256xf32> to vector<8x256xf32>
    %17 = arith.mulf %14, %16 : vector<8x256xf32>
    %18 = arith.mulf %17, %17 : vector<8x256xf32>
    %cst_11 = arith.constant dense<0.000000e+00> : vector<8xf32>
    %19 = vector.multi_reduction <add>, %18, %cst_11 [1] : vector<8x256xf32> to vector<8xf32>
    %20 = vector.shape_cast %19 : vector<8xf32> to vector<8x1xf32>
    %cst_12 = arith.constant 0.00520833349 : f32
    %21 = vector.broadcast %cst_12 : f32 to vector<8x1xf32>
    %22 = arith.mulf %20, %21 : vector<8x1xf32>
    %cst_13 = arith.constant 9.99999974E-6 : f32
    %23 = vector.broadcast %cst_13 : f32 to vector<8x1xf32>
    %24 = arith.addf %22, %23 : vector<8x1xf32>
    %25 = math.rsqrt %24 : vector<8x1xf32>
    %26 = vector.broadcast %25 : vector<8x1xf32> to vector<8x256xf32>
    %27 = arith.mulf %17, %26 : vector<8x256xf32>
    %28 = arith.negf %27 : vector<8x256xf32>
    %29 = math.exp %28 : vector<8x256xf32>
    %cst_14 = arith.constant 1.000000e+00 : f32
    %30 = vector.broadcast %cst_14 : f32 to vector<8x256xf32>
    %31 = arith.addf %30, %29 : vector<8x256xf32>
    %32 = arith.divf %30, %31 : vector<8x256xf32>
    %33 = arith.mulf %27, %32 : vector<8x256xf32>
    %c48_i32 = arith.constant 48 : i32
    %34 = tpu.dynamic_rotate %33 by %c48_i32 dim 1 : vector<8x256xf32>, i32 -> vector<8x256xf32>
    %35 = arith.extf %0 : vector<1x256xbf16> to vector<1x256xf32>
    %36 = vector.broadcast %35 : vector<1x256xf32> to vector<8x256xf32>
    %37 = arith.mulf %34, %36 : vector<8x256xf32>
    %c8_i32 = arith.constant 8 : i32
    %38 = tpu.dynamic_rotate %37 by %c8_i32 dim 1 : vector<8x256xf32>, i32 -> vector<8x256xf32>
    %39 = arith.extf %2 : vector<1x256xbf16> to vector<1x256xf32>
    %40 = vector.broadcast %39 : vector<1x256xf32> to vector<8x256xf32>
    %41 = arith.mulf %38, %40 : vector<8x256xf32>
    %c1_i32 = arith.constant 1 : i32
    %42 = tpu.dynamic_rotate %41 by %c1_i32 dim 1 : vector<8x256xf32>, i32 -> vector<8x256xf32>
    %43 = arith.extf %4 : vector<1x256xbf16> to vector<1x256xf32>
    %44 = vector.broadcast %43 : vector<1x256xf32> to vector<8x256xf32>
    %45 = arith.mulf %42, %44 : vector<8x256xf32>
    %c255_i32 = arith.constant 255 : i32
    %46 = tpu.dynamic_rotate %41 by %c255_i32 dim 1 : vector<8x256xf32>, i32 -> vector<8x256xf32>
    %47 = arith.extf %5 : vector<1x256xbf16> to vector<1x256xf32>
    %48 = vector.broadcast %47 : vector<1x256xf32> to vector<8x256xf32>
    %49 = arith.mulf %46, %48 : vector<8x256xf32>
    %c1_i32_15 = arith.constant 1 : i32
    %50 = tpu.dynamic_rotate %37 by %c1_i32_15 dim 1 : vector<8x256xf32>, i32 -> vector<8x256xf32>
    %51 = arith.extf %4 : vector<1x256xbf16> to vector<1x256xf32>
    %52 = vector.broadcast %51 : vector<1x256xf32> to vector<8x256xf32>
    %53 = arith.mulf %50, %52 : vector<8x256xf32>
    %c255_i32_16 = arith.constant 255 : i32
    %54 = tpu.dynamic_rotate %37 by %c255_i32_16 dim 1 : vector<8x256xf32>, i32 -> vector<8x256xf32>
    %55 = arith.extf %5 : vector<1x256xbf16> to vector<1x256xf32>
    %56 = vector.broadcast %55 : vector<1x256xf32> to vector<8x256xf32>
    %57 = arith.mulf %54, %56 : vector<8x256xf32>
    %c248_i32 = arith.constant 248 : i32
    %58 = tpu.dynamic_rotate %37 by %c248_i32 dim 1 : vector<8x256xf32>, i32 -> vector<8x256xf32>
    %59 = arith.extf %3 : vector<1x256xbf16> to vector<1x256xf32>
    %60 = vector.broadcast %59 : vector<1x256xf32> to vector<8x256xf32>
    %61 = arith.mulf %58, %60 : vector<8x256xf32>
    %c1_i32_17 = arith.constant 1 : i32
    %62 = tpu.dynamic_rotate %61 by %c1_i32_17 dim 1 : vector<8x256xf32>, i32 -> vector<8x256xf32>
    %63 = arith.extf %4 : vector<1x256xbf16> to vector<1x256xf32>
    %64 = vector.broadcast %63 : vector<1x256xf32> to vector<8x256xf32>
    %65 = arith.mulf %62, %64 : vector<8x256xf32>
    %c255_i32_18 = arith.constant 255 : i32
    %66 = tpu.dynamic_rotate %61 by %c255_i32_18 dim 1 : vector<8x256xf32>, i32 -> vector<8x256xf32>
    %67 = arith.extf %5 : vector<1x256xbf16> to vector<1x256xf32>
    %68 = vector.broadcast %67 : vector<1x256xf32> to vector<8x256xf32>
    %69 = arith.mulf %66, %68 : vector<8x256xf32>
    %70 = tpu.concatenate %45, %41, %49, %53, %37, %57, %65, %61, %69 in 0 : vector<8x256xf32>, vector<8x256xf32>, vector<8x256xf32>, vector<8x256xf32>, vector<8x256xf32>, vector<8x256xf32>, vector<8x256xf32>, vector<8x256xf32>, vector<8x256xf32> -> vector<72x256xf32>
    %71 = arith.truncf %70 : vector<72x256xf32> to vector<72x256xbf16>
    %c0_19 = arith.constant 0 : index
    %c0_20 = arith.constant 0 : index
    %c0_21 = arith.constant 0 : index
    %72 = vector.load %arg3[%c0_19, %c0_20, %c0_21] : memref<3x8x72xbf16, #tpu.memory_space<vmem>>, vector<1x8x72xbf16>
    %73 = vector.shape_cast %72 : vector<1x8x72xbf16> to vector<8x72xbf16>
    %cst_22 = arith.constant dense<0.000000e+00> : vector<8x256xf32>
    %74 = tpu.matmul %73, %71, %cst_22 {dimension_numbers = #tpu.dot_dimension_numbers<[1], [0], [0], [1], [0, 0, 1, 1], [], []>} : vector<8x72xbf16>, vector<72x256xbf16>, vector<8x256xf32> -> vector<8x256xf32>
    %c8_i32_23 = arith.constant 8 : i32
    %75 = tpu.dynamic_rotate %33 by %c8_i32_23 dim 1 : vector<8x256xf32>, i32 -> vector<8x256xf32>
    %76 = arith.extf %2 : vector<1x256xbf16> to vector<1x256xf32>
    %77 = vector.broadcast %76 : vector<1x256xf32> to vector<8x256xf32>
    %78 = arith.mulf %75, %77 : vector<8x256xf32>
    %c1_i32_24 = arith.constant 1 : i32
    %79 = tpu.dynamic_rotate %78 by %c1_i32_24 dim 1 : vector<8x256xf32>, i32 -> vector<8x256xf32>
    %80 = arith.extf %4 : vector<1x256xbf16> to vector<1x256xf32>
    %81 = vector.broadcast %80 : vector<1x256xf32> to vector<8x256xf32>
    %82 = arith.mulf %79, %81 : vector<8x256xf32>
    %c255_i32_25 = arith.constant 255 : i32
    %83 = tpu.dynamic_rotate %78 by %c255_i32_25 dim 1 : vector<8x256xf32>, i32 -> vector<8x256xf32>
    %84 = arith.extf %5 : vector<1x256xbf16> to vector<1x256xf32>
    %85 = vector.broadcast %84 : vector<1x256xf32> to vector<8x256xf32>
    %86 = arith.mulf %83, %85 : vector<8x256xf32>
    %c1_i32_26 = arith.constant 1 : i32
    %87 = tpu.dynamic_rotate %33 by %c1_i32_26 dim 1 : vector<8x256xf32>, i32 -> vector<8x256xf32>
    %88 = arith.extf %4 : vector<1x256xbf16> to vector<1x256xf32>
    %89 = vector.broadcast %88 : vector<1x256xf32> to vector<8x256xf32>
    %90 = arith.mulf %87, %89 : vector<8x256xf32>
    %c255_i32_27 = arith.constant 255 : i32
    %91 = tpu.dynamic_rotate %33 by %c255_i32_27 dim 1 : vector<8x256xf32>, i32 -> vector<8x256xf32>
    %92 = arith.extf %5 : vector<1x256xbf16> to vector<1x256xf32>
    %93 = vector.broadcast %92 : vector<1x256xf32> to vector<8x256xf32>
    %94 = arith.mulf %91, %93 : vector<8x256xf32>
    %c248_i32_28 = arith.constant 248 : i32
    %95 = tpu.dynamic_rotate %33 by %c248_i32_28 dim 1 : vector<8x256xf32>, i32 -> vector<8x256xf32>
    %96 = arith.extf %3 : vector<1x256xbf16> to vector<1x256xf32>
    %97 = vector.broadcast %96 : vector<1x256xf32> to vector<8x256xf32>
    %98 = arith.mulf %95, %97 : vector<8x256xf32>
    %c1_i32_29 = arith.constant 1 : i32
    %99 = tpu.dynamic_rotate %98 by %c1_i32_29 dim 1 : vector<8x256xf32>, i32 -> vector<8x256xf32>
    %100 = arith.extf %4 : vector<1x256xbf16> to vector<1x256xf32>
    %101 = vector.broadcast %100 : vector<1x256xf32> to vector<8x256xf32>
    %102 = arith.mulf %99, %101 : vector<8x256xf32>
    %c255_i32_30 = arith.constant 255 : i32
    %103 = tpu.dynamic_rotate %98 by %c255_i32_30 dim 1 : vector<8x256xf32>, i32 -> vector<8x256xf32>
    %104 = arith.extf %5 : vector<1x256xbf16> to vector<1x256xf32>
    %105 = vector.broadcast %104 : vector<1x256xf32> to vector<8x256xf32>
    %106 = arith.mulf %103, %105 : vector<8x256xf32>
    %107 = tpu.concatenate %82, %78, %86, %90, %33, %94, %102, %98, %106 in 0 : vector<8x256xf32>, vector<8x256xf32>, vector<8x256xf32>, vector<8x256xf32>, vector<8x256xf32>, vector<8x256xf32>, vector<8x256xf32>, vector<8x256xf32>, vector<8x256xf32> -> vector<72x256xf32>
    %108 = arith.truncf %107 : vector<72x256xf32> to vector<72x256xbf16>
    %c1_31 = arith.constant 1 : index
    %c0_32 = arith.constant 0 : index
    %c0_33 = arith.constant 0 : index
    %109 = vector.load %arg3[%c1_31, %c0_32, %c0_33] : memref<3x8x72xbf16, #tpu.memory_space<vmem>>, vector<1x8x72xbf16>
    %110 = vector.shape_cast %109 : vector<1x8x72xbf16> to vector<8x72xbf16>
    %cst_34 = arith.constant dense<0.000000e+00> : vector<8x256xf32>
    %111 = tpu.matmul %110, %108, %cst_34 {dimension_numbers = #tpu.dot_dimension_numbers<[1], [0], [0], [1], [0, 0, 1, 1], [], []>} : vector<8x72xbf16>, vector<72x256xbf16>, vector<8x256xf32> -> vector<8x256xf32>
    %112 = arith.addf %74, %111 : vector<8x256xf32>
    %c208_i32 = arith.constant 208 : i32
    %113 = tpu.dynamic_rotate %33 by %c208_i32 dim 1 : vector<8x256xf32>, i32 -> vector<8x256xf32>
    %114 = arith.extf %1 : vector<1x256xbf16> to vector<1x256xf32>
    %115 = vector.broadcast %114 : vector<1x256xf32> to vector<8x256xf32>
    %116 = arith.mulf %113, %115 : vector<8x256xf32>
    %c8_i32_35 = arith.constant 8 : i32
    %117 = tpu.dynamic_rotate %116 by %c8_i32_35 dim 1 : vector<8x256xf32>, i32 -> vector<8x256xf32>
    %118 = arith.extf %2 : vector<1x256xbf16> to vector<1x256xf32>
    %119 = vector.broadcast %118 : vector<1x256xf32> to vector<8x256xf32>
    %120 = arith.mulf %117, %119 : vector<8x256xf32>
    %c1_i32_36 = arith.constant 1 : i32
    %121 = tpu.dynamic_rotate %120 by %c1_i32_36 dim 1 : vector<8x256xf32>, i32 -> vector<8x256xf32>
    %122 = arith.extf %4 : vector<1x256xbf16> to vector<1x256xf32>
    %123 = vector.broadcast %122 : vector<1x256xf32> to vector<8x256xf32>
    %124 = arith.mulf %121, %123 : vector<8x256xf32>
    %c255_i32_37 = arith.constant 255 : i32
    %125 = tpu.dynamic_rotate %120 by %c255_i32_37 dim 1 : vector<8x256xf32>, i32 -> vector<8x256xf32>
    %126 = arith.extf %5 : vector<1x256xbf16> to vector<1x256xf32>
    %127 = vector.broadcast %126 : vector<1x256xf32> to vector<8x256xf32>
    %128 = arith.mulf %125, %127 : vector<8x256xf32>
    %c1_i32_38 = arith.constant 1 : i32
    %129 = tpu.dynamic_rotate %116 by %c1_i32_38 dim 1 : vector<8x256xf32>, i32 -> vector<8x256xf32>
    %130 = arith.extf %4 : vector<1x256xbf16> to vector<1x256xf32>
    %131 = vector.broadcast %130 : vector<1x256xf32> to vector<8x256xf32>
    %132 = arith.mulf %129, %131 : vector<8x256xf32>
    %c255_i32_39 = arith.constant 255 : i32
    %133 = tpu.dynamic_rotate %116 by %c255_i32_39 dim 1 : vector<8x256xf32>, i32 -> vector<8x256xf32>
    %134 = arith.extf %5 : vector<1x256xbf16> to vector<1x256xf32>
    %135 = vector.broadcast %134 : vector<1x256xf32> to vector<8x256xf32>
    %136 = arith.mulf %133, %135 : vector<8x256xf32>
    %c248_i32_40 = arith.constant 248 : i32
    %137 = tpu.dynamic_rotate %116 by %c248_i32_40 dim 1 : vector<8x256xf32>, i32 -> vector<8x256xf32>
    %138 = arith.extf %3 : vector<1x256xbf16> to vector<1x256xf32>
    %139 = vector.broadcast %138 : vector<1x256xf32> to vector<8x256xf32>
    %140 = arith.mulf %137, %139 : vector<8x256xf32>
    %c1_i32_41 = arith.constant 1 : i32
    %141 = tpu.dynamic_rotate %140 by %c1_i32_41 dim 1 : vector<8x256xf32>, i32 -> vector<8x256xf32>
    %142 = arith.extf %4 : vector<1x256xbf16> to vector<1x256xf32>
    %143 = vector.broadcast %142 : vector<1x256xf32> to vector<8x256xf32>
    %144 = arith.mulf %141, %143 : vector<8x256xf32>
    %c255_i32_42 = arith.constant 255 : i32
    %145 = tpu.dynamic_rotate %140 by %c255_i32_42 dim 1 : vector<8x256xf32>, i32 -> vector<8x256xf32>
    %146 = arith.extf %5 : vector<1x256xbf16> to vector<1x256xf32>
    %147 = vector.broadcast %146 : vector<1x256xf32> to vector<8x256xf32>
    %148 = arith.mulf %145, %147 : vector<8x256xf32>
    %149 = tpu.concatenate %124, %120, %128, %132, %116, %136, %144, %140, %148 in 0 : vector<8x256xf32>, vector<8x256xf32>, vector<8x256xf32>, vector<8x256xf32>, vector<8x256xf32>, vector<8x256xf32>, vector<8x256xf32>, vector<8x256xf32>, vector<8x256xf32> -> vector<72x256xf32>
    %150 = arith.truncf %149 : vector<72x256xf32> to vector<72x256xbf16>
    %c2_43 = arith.constant 2 : index
    %c0_44 = arith.constant 0 : index
    %c0_45 = arith.constant 0 : index
    %151 = vector.load %arg3[%c2_43, %c0_44, %c0_45] : memref<3x8x72xbf16, #tpu.memory_space<vmem>>, vector<1x8x72xbf16>
    %152 = vector.shape_cast %151 : vector<1x8x72xbf16> to vector<8x72xbf16>
    %cst_46 = arith.constant dense<0.000000e+00> : vector<8x256xf32>
    %153 = tpu.matmul %152, %150, %cst_46 {dimension_numbers = #tpu.dot_dimension_numbers<[1], [0], [0], [1], [0, 0, 1, 1], [], []>} : vector<8x72xbf16>, vector<72x256xbf16>, vector<8x256xf32> -> vector<8x256xf32>
    %154 = arith.addf %112, %153 : vector<8x256xf32>
    %c0_47 = arith.constant 0 : index
    %c0_48 = arith.constant 0 : index
    %155 = vector.load %arg4[%c0_47, %c0_48] : memref<8x1xf32, #tpu.memory_space<vmem>>, vector<8x1xf32>
    %156 = vector.broadcast %155 : vector<8x1xf32> to vector<8x256xf32>
    %157 = arith.addf %154, %156 : vector<8x256xf32>
    %158 = arith.extf %6 : vector<1x256xbf16> to vector<1x256xf32>
    %159 = vector.broadcast %158 : vector<1x256xf32> to vector<8x256xf32>
    %160 = arith.mulf %157, %159 : vector<8x256xf32>
    %cst_49 = arith.constant dense<0.000000e+00> : vector<8xf32>
    %161 = vector.multi_reduction <add>, %160, %cst_49 [1] : vector<8x256xf32> to vector<8xf32>
    %162 = vector.shape_cast %161 : vector<8xf32> to vector<8x1xf32>
    %cst_50 = arith.constant 0.00520833349 : f32
    %163 = vector.broadcast %cst_50 : f32 to vector<8x1xf32>
    %164 = arith.mulf %162, %163 : vector<8x1xf32>
    %165 = vector.broadcast %164 : vector<8x1xf32> to vector<8x256xf32>
    %166 = arith.subf %160, %165 : vector<8x256xf32>
    %167 = arith.extf %6 : vector<1x256xbf16> to vector<1x256xf32>
    %168 = vector.broadcast %167 : vector<1x256xf32> to vector<8x256xf32>
    %169 = arith.mulf %166, %168 : vector<8x256xf32>
    %170 = arith.mulf %169, %169 : vector<8x256xf32>
    %cst_51 = arith.constant dense<0.000000e+00> : vector<8xf32>
    %171 = vector.multi_reduction <add>, %170, %cst_51 [1] : vector<8x256xf32> to vector<8xf32>
    %172 = vector.shape_cast %171 : vector<8xf32> to vector<8x1xf32>
    %cst_52 = arith.constant 0.00520833349 : f32
    %173 = vector.broadcast %cst_52 : f32 to vector<8x1xf32>
    %174 = arith.mulf %172, %173 : vector<8x1xf32>
    %cst_53 = arith.constant 9.99999974E-6 : f32
    %175 = vector.broadcast %cst_53 : f32 to vector<8x1xf32>
    %176 = arith.addf %174, %175 : vector<8x1xf32>
    %177 = math.rsqrt %176 : vector<8x1xf32>
    %178 = vector.broadcast %177 : vector<8x1xf32> to vector<8x256xf32>
    %179 = arith.mulf %169, %178 : vector<8x256xf32>
    %180 = arith.negf %179 : vector<8x256xf32>
    %181 = math.exp %180 : vector<8x256xf32>
    %cst_54 = arith.constant 1.000000e+00 : f32
    %182 = vector.broadcast %cst_54 : f32 to vector<8x256xf32>
    %183 = arith.addf %182, %181 : vector<8x256xf32>
    %184 = arith.divf %182, %183 : vector<8x256xf32>
    %185 = arith.mulf %179, %184 : vector<8x256xf32>
    %c48_i32_55 = arith.constant 48 : i32
    %186 = tpu.dynamic_rotate %185 by %c48_i32_55 dim 1 : vector<8x256xf32>, i32 -> vector<8x256xf32>
    %187 = arith.extf %0 : vector<1x256xbf16> to vector<1x256xf32>
    %188 = vector.broadcast %187 : vector<1x256xf32> to vector<8x256xf32>
    %189 = arith.mulf %186, %188 : vector<8x256xf32>
    %c8_i32_56 = arith.constant 8 : i32
    %190 = tpu.dynamic_rotate %189 by %c8_i32_56 dim 1 : vector<8x256xf32>, i32 -> vector<8x256xf32>
    %191 = arith.extf %2 : vector<1x256xbf16> to vector<1x256xf32>
    %192 = vector.broadcast %191 : vector<1x256xf32> to vector<8x256xf32>
    %193 = arith.mulf %190, %192 : vector<8x256xf32>
    %c1_i32_57 = arith.constant 1 : i32
    %194 = tpu.dynamic_rotate %193 by %c1_i32_57 dim 1 : vector<8x256xf32>, i32 -> vector<8x256xf32>
    %195 = arith.extf %4 : vector<1x256xbf16> to vector<1x256xf32>
    %196 = vector.broadcast %195 : vector<1x256xf32> to vector<8x256xf32>
    %197 = arith.mulf %194, %196 : vector<8x256xf32>
    %c255_i32_58 = arith.constant 255 : i32
    %198 = tpu.dynamic_rotate %193 by %c255_i32_58 dim 1 : vector<8x256xf32>, i32 -> vector<8x256xf32>
    %199 = arith.extf %5 : vector<1x256xbf16> to vector<1x256xf32>
    %200 = vector.broadcast %199 : vector<1x256xf32> to vector<8x256xf32>
    %201 = arith.mulf %198, %200 : vector<8x256xf32>
    %c1_i32_59 = arith.constant 1 : i32
    %202 = tpu.dynamic_rotate %189 by %c1_i32_59 dim 1 : vector<8x256xf32>, i32 -> vector<8x256xf32>
    %203 = arith.extf %4 : vector<1x256xbf16> to vector<1x256xf32>
    %204 = vector.broadcast %203 : vector<1x256xf32> to vector<8x256xf32>
    %205 = arith.mulf %202, %204 : vector<8x256xf32>
    %c255_i32_60 = arith.constant 255 : i32
    %206 = tpu.dynamic_rotate %189 by %c255_i32_60 dim 1 : vector<8x256xf32>, i32 -> vector<8x256xf32>
    %207 = arith.extf %5 : vector<1x256xbf16> to vector<1x256xf32>
    %208 = vector.broadcast %207 : vector<1x256xf32> to vector<8x256xf32>
    %209 = arith.mulf %206, %208 : vector<8x256xf32>
    %c248_i32_61 = arith.constant 248 : i32
    %210 = tpu.dynamic_rotate %189 by %c248_i32_61 dim 1 : vector<8x256xf32>, i32 -> vector<8x256xf32>
    %211 = arith.extf %3 : vector<1x256xbf16> to vector<1x256xf32>
    %212 = vector.broadcast %211 : vector<1x256xf32> to vector<8x256xf32>
    %213 = arith.mulf %210, %212 : vector<8x256xf32>
    %c1_i32_62 = arith.constant 1 : i32
    %214 = tpu.dynamic_rotate %213 by %c1_i32_62 dim 1 : vector<8x256xf32>, i32 -> vector<8x256xf32>
    %215 = arith.extf %4 : vector<1x256xbf16> to vector<1x256xf32>
    %216 = vector.broadcast %215 : vector<1x256xf32> to vector<8x256xf32>
    %217 = arith.mulf %214, %216 : vector<8x256xf32>
    %c255_i32_63 = arith.constant 255 : i32
    %218 = tpu.dynamic_rotate %213 by %c255_i32_63 dim 1 : vector<8x256xf32>, i32 -> vector<8x256xf32>
    %219 = arith.extf %5 : vector<1x256xbf16> to vector<1x256xf32>
    %220 = vector.broadcast %219 : vector<1x256xf32> to vector<8x256xf32>
    %221 = arith.mulf %218, %220 : vector<8x256xf32>
    %222 = tpu.concatenate %197, %193, %201, %205, %189, %209, %217, %213, %221 in 0 : vector<8x256xf32>, vector<8x256xf32>, vector<8x256xf32>, vector<8x256xf32>, vector<8x256xf32>, vector<8x256xf32>, vector<8x256xf32>, vector<8x256xf32>, vector<8x256xf32> -> vector<72x256xf32>
    %223 = arith.truncf %222 : vector<72x256xf32> to vector<72x256xbf16>
    %c0_64 = arith.constant 0 : index
    %c0_65 = arith.constant 0 : index
    %c0_66 = arith.constant 0 : index
    %224 = vector.load %arg5[%c0_64, %c0_65, %c0_66] : memref<3x8x72xbf16, #tpu.memory_space<vmem>>, vector<1x8x72xbf16>
    %225 = vector.shape_cast %224 : vector<1x8x72xbf16> to vector<8x72xbf16>
    %cst_67 = arith.constant dense<0.000000e+00> : vector<8x256xf32>
    %226 = tpu.matmul %225, %223, %cst_67 {dimension_numbers = #tpu.dot_dimension_numbers<[1], [0], [0], [1], [0, 0, 1, 1], [], []>} : vector<8x72xbf16>, vector<72x256xbf16>, vector<8x256xf32> -> vector<8x256xf32>
    %c8_i32_68 = arith.constant 8 : i32
    %227 = tpu.dynamic_rotate %185 by %c8_i32_68 dim 1 : vector<8x256xf32>, i32 -> vector<8x256xf32>
    %228 = arith.extf %2 : vector<1x256xbf16> to vector<1x256xf32>
    %229 = vector.broadcast %228 : vector<1x256xf32> to vector<8x256xf32>
    %230 = arith.mulf %227, %229 : vector<8x256xf32>
    %c1_i32_69 = arith.constant 1 : i32
    %231 = tpu.dynamic_rotate %230 by %c1_i32_69 dim 1 : vector<8x256xf32>, i32 -> vector<8x256xf32>
    %232 = arith.extf %4 : vector<1x256xbf16> to vector<1x256xf32>
    %233 = vector.broadcast %232 : vector<1x256xf32> to vector<8x256xf32>
    %234 = arith.mulf %231, %233 : vector<8x256xf32>
    %c255_i32_70 = arith.constant 255 : i32
    %235 = tpu.dynamic_rotate %230 by %c255_i32_70 dim 1 : vector<8x256xf32>, i32 -> vector<8x256xf32>
    %236 = arith.extf %5 : vector<1x256xbf16> to vector<1x256xf32>
    %237 = vector.broadcast %236 : vector<1x256xf32> to vector<8x256xf32>
    %238 = arith.mulf %235, %237 : vector<8x256xf32>
    %c1_i32_71 = arith.constant 1 : i32
    %239 = tpu.dynamic_rotate %185 by %c1_i32_71 dim 1 : vector<8x256xf32>, i32 -> vector<8x256xf32>
    %240 = arith.extf %4 : vector<1x256xbf16> to vector<1x256xf32>
    %241 = vector.broadcast %240 : vector<1x256xf32> to vector<8x256xf32>
    %242 = arith.mulf %239, %241 : vector<8x256xf32>
    %c255_i32_72 = arith.constant 255 : i32
    %243 = tpu.dynamic_rotate %185 by %c255_i32_72 dim 1 : vector<8x256xf32>, i32 -> vector<8x256xf32>
    %244 = arith.extf %5 : vector<1x256xbf16> to vector<1x256xf32>
    %245 = vector.broadcast %244 : vector<1x256xf32> to vector<8x256xf32>
    %246 = arith.mulf %243, %245 : vector<8x256xf32>
    %c248_i32_73 = arith.constant 248 : i32
    %247 = tpu.dynamic_rotate %185 by %c248_i32_73 dim 1 : vector<8x256xf32>, i32 -> vector<8x256xf32>
    %248 = arith.extf %3 : vector<1x256xbf16> to vector<1x256xf32>
    %249 = vector.broadcast %248 : vector<1x256xf32> to vector<8x256xf32>
    %250 = arith.mulf %247, %249 : vector<8x256xf32>
    %c1_i32_74 = arith.constant 1 : i32
    %251 = tpu.dynamic_rotate %250 by %c1_i32_74 dim 1 : vector<8x256xf32>, i32 -> vector<8x256xf32>
    %252 = arith.extf %4 : vector<1x256xbf16> to vector<1x256xf32>
    %253 = vector.broadcast %252 : vector<1x256xf32> to vector<8x256xf32>
    %254 = arith.mulf %251, %253 : vector<8x256xf32>
    %c255_i32_75 = arith.constant 255 : i32
    %255 = tpu.dynamic_rotate %250 by %c255_i32_75 dim 1 : vector<8x256xf32>, i32 -> vector<8x256xf32>
    %256 = arith.extf %5 : vector<1x256xbf16> to vector<1x256xf32>
    %257 = vector.broadcast %256 : vector<1x256xf32> to vector<8x256xf32>
    %258 = arith.mulf %255, %257 : vector<8x256xf32>
    %259 = tpu.concatenate %234, %230, %238, %242, %185, %246, %254, %250, %258 in 0 : vector<8x256xf32>, vector<8x256xf32>, vector<8x256xf32>, vector<8x256xf32>, vector<8x256xf32>, vector<8x256xf32>, vector<8x256xf32>, vector<8x256xf32>, vector<8x256xf32> -> vector<72x256xf32>
    %260 = arith.truncf %259 : vector<72x256xf32> to vector<72x256xbf16>
    %c1_76 = arith.constant 1 : index
    %c0_77 = arith.constant 0 : index
    %c0_78 = arith.constant 0 : index
    %261 = vector.load %arg5[%c1_76, %c0_77, %c0_78] : memref<3x8x72xbf16, #tpu.memory_space<vmem>>, vector<1x8x72xbf16>
    %262 = vector.shape_cast %261 : vector<1x8x72xbf16> to vector<8x72xbf16>
    %cst_79 = arith.constant dense<0.000000e+00> : vector<8x256xf32>
    %263 = tpu.matmul %262, %260, %cst_79 {dimension_numbers = #tpu.dot_dimension_numbers<[1], [0], [0], [1], [0, 0, 1, 1], [], []>} : vector<8x72xbf16>, vector<72x256xbf16>, vector<8x256xf32> -> vector<8x256xf32>
    %264 = arith.addf %226, %263 : vector<8x256xf32>
    %c208_i32_80 = arith.constant 208 : i32
    %265 = tpu.dynamic_rotate %185 by %c208_i32_80 dim 1 : vector<8x256xf32>, i32 -> vector<8x256xf32>
    %266 = arith.extf %1 : vector<1x256xbf16> to vector<1x256xf32>
    %267 = vector.broadcast %266 : vector<1x256xf32> to vector<8x256xf32>
    %268 = arith.mulf %265, %267 : vector<8x256xf32>
    %c8_i32_81 = arith.constant 8 : i32
    %269 = tpu.dynamic_rotate %268 by %c8_i32_81 dim 1 : vector<8x256xf32>, i32 -> vector<8x256xf32>
    %270 = arith.extf %2 : vector<1x256xbf16> to vector<1x256xf32>
    %271 = vector.broadcast %270 : vector<1x256xf32> to vector<8x256xf32>
    %272 = arith.mulf %269, %271 : vector<8x256xf32>
    %c1_i32_82 = arith.constant 1 : i32
    %273 = tpu.dynamic_rotate %272 by %c1_i32_82 dim 1 : vector<8x256xf32>, i32 -> vector<8x256xf32>
    %274 = arith.extf %4 : vector<1x256xbf16> to vector<1x256xf32>
    %275 = vector.broadcast %274 : vector<1x256xf32> to vector<8x256xf32>
    %276 = arith.mulf %273, %275 : vector<8x256xf32>
    %c255_i32_83 = arith.constant 255 : i32
    %277 = tpu.dynamic_rotate %272 by %c255_i32_83 dim 1 : vector<8x256xf32>, i32 -> vector<8x256xf32>
    %278 = arith.extf %5 : vector<1x256xbf16> to vector<1x256xf32>
    %279 = vector.broadcast %278 : vector<1x256xf32> to vector<8x256xf32>
    %280 = arith.mulf %277, %279 : vector<8x256xf32>
    %c1_i32_84 = arith.constant 1 : i32
    %281 = tpu.dynamic_rotate %268 by %c1_i32_84 dim 1 : vector<8x256xf32>, i32 -> vector<8x256xf32>
    %282 = arith.extf %4 : vector<1x256xbf16> to vector<1x256xf32>
    %283 = vector.broadcast %282 : vector<1x256xf32> to vector<8x256xf32>
    %284 = arith.mulf %281, %283 : vector<8x256xf32>
    %c255_i32_85 = arith.constant 255 : i32
    %285 = tpu.dynamic_rotate %268 by %c255_i32_85 dim 1 : vector<8x256xf32>, i32 -> vector<8x256xf32>
    %286 = arith.extf %5 : vector<1x256xbf16> to vector<1x256xf32>
    %287 = vector.broadcast %286 : vector<1x256xf32> to vector<8x256xf32>
    %288 = arith.mulf %285, %287 : vector<8x256xf32>
    %c248_i32_86 = arith.constant 248 : i32
    %289 = tpu.dynamic_rotate %268 by %c248_i32_86 dim 1 : vector<8x256xf32>, i32 -> vector<8x256xf32>
    %290 = arith.extf %3 : vector<1x256xbf16> to vector<1x256xf32>
    %291 = vector.broadcast %290 : vector<1x256xf32> to vector<8x256xf32>
    %292 = arith.mulf %289, %291 : vector<8x256xf32>
    %c1_i32_87 = arith.constant 1 : i32
    %293 = tpu.dynamic_rotate %292 by %c1_i32_87 dim 1 : vector<8x256xf32>, i32 -> vector<8x256xf32>
    %294 = arith.extf %4 : vector<1x256xbf16> to vector<1x256xf32>
    %295 = vector.broadcast %294 : vector<1x256xf32> to vector<8x256xf32>
    %296 = arith.mulf %293, %295 : vector<8x256xf32>
    %c255_i32_88 = arith.constant 255 : i32
    %297 = tpu.dynamic_rotate %292 by %c255_i32_88 dim 1 : vector<8x256xf32>, i32 -> vector<8x256xf32>
    %298 = arith.extf %5 : vector<1x256xbf16> to vector<1x256xf32>
    %299 = vector.broadcast %298 : vector<1x256xf32> to vector<8x256xf32>
    %300 = arith.mulf %297, %299 : vector<8x256xf32>
    %301 = tpu.concatenate %276, %272, %280, %284, %268, %288, %296, %292, %300 in 0 : vector<8x256xf32>, vector<8x256xf32>, vector<8x256xf32>, vector<8x256xf32>, vector<8x256xf32>, vector<8x256xf32>, vector<8x256xf32>, vector<8x256xf32>, vector<8x256xf32> -> vector<72x256xf32>
    %302 = arith.truncf %301 : vector<72x256xf32> to vector<72x256xbf16>
    %c2_89 = arith.constant 2 : index
    %c0_90 = arith.constant 0 : index
    %c0_91 = arith.constant 0 : index
    %303 = vector.load %arg5[%c2_89, %c0_90, %c0_91] : memref<3x8x72xbf16, #tpu.memory_space<vmem>>, vector<1x8x72xbf16>
    %304 = vector.shape_cast %303 : vector<1x8x72xbf16> to vector<8x72xbf16>
    %cst_92 = arith.constant dense<0.000000e+00> : vector<8x256xf32>
    %305 = tpu.matmul %304, %302, %cst_92 {dimension_numbers = #tpu.dot_dimension_numbers<[1], [0], [0], [1], [0, 0, 1, 1], [], []>} : vector<8x72xbf16>, vector<72x256xbf16>, vector<8x256xf32> -> vector<8x256xf32>
    %306 = arith.addf %264, %305 : vector<8x256xf32>
    %c0_93 = arith.constant 0 : index
    %c0_94 = arith.constant 0 : index
    %307 = vector.load %arg6[%c0_93, %c0_94] : memref<8x1xf32, #tpu.memory_space<vmem>>, vector<8x1xf32>
    %308 = vector.broadcast %307 : vector<8x1xf32> to vector<8x256xf32>
    %309 = arith.addf %306, %308 : vector<8x256xf32>
    %310 = arith.extf %6 : vector<1x256xbf16> to vector<1x256xf32>
    %311 = vector.broadcast %310 : vector<1x256xf32> to vector<8x256xf32>
    %312 = arith.mulf %309, %311 : vector<8x256xf32>
    %cst_95 = arith.constant dense<0.000000e+00> : vector<8xf32>
    %313 = vector.multi_reduction <add>, %312, %cst_95 [1] : vector<8x256xf32> to vector<8xf32>
    %314 = vector.shape_cast %313 : vector<8xf32> to vector<8x1xf32>
    %cst_96 = arith.constant 0.00520833349 : f32
    %315 = vector.broadcast %cst_96 : f32 to vector<8x1xf32>
    %316 = arith.mulf %314, %315 : vector<8x1xf32>
    %c0_97 = arith.constant 0 : index
    %c0_98 = arith.constant 0 : index
    %317 = vector.load %arg7[%c0_97, %c0_98] : memref<8x2xf32, #tpu.memory_space<vmem>>, vector<8x2xf32>
    %318 = vector.broadcast %316 : vector<8x1xf32> to vector<8x2xf32>
    %319 = arith.mulf %317, %318 : vector<8x2xf32>
    %cst_99 = arith.constant dense<0.000000e+00> : vector<2xf32>
    %320 = vector.multi_reduction <add>, %319, %cst_99 [0] : vector<8x2xf32> to vector<2xf32>
    %321 = vector.shape_cast %320 : vector<2xf32> to vector<1x2xf32>
    %c0_100 = arith.constant 0 : index
    %c0_101 = arith.constant 0 : index
    %322 = vector.load %arg8[%c0_100, %c0_101] : memref<1x2xf32, #tpu.memory_space<vmem>>, vector<1x2xf32>
    %323 = arith.addf %321, %322 : vector<1x2xf32>
    %cst_102 = arith.constant 0.000000e+00 : f32
    %324 = vector.broadcast %cst_102 : f32 to vector<1x2xf32>
    %325 = arith.maximumf %323, %324 : vector<1x2xf32>
    %c0_103 = arith.constant 0 : index
    %c0_104 = arith.constant 0 : index
    %326 = vector.load %arg9[%c0_103, %c0_104] : memref<8x2xf32, #tpu.memory_space<vmem>>, vector<8x2xf32>
    %327 = vector.broadcast %325 : vector<1x2xf32> to vector<8x2xf32>
    %328 = arith.mulf %326, %327 : vector<8x2xf32>
    %cst_105 = arith.constant dense<0.000000e+00> : vector<8xf32>
    %329 = vector.multi_reduction <add>, %328, %cst_105 [1] : vector<8x2xf32> to vector<8xf32>
    %330 = vector.shape_cast %329 : vector<8xf32> to vector<8x1xf32>
    %c0_106 = arith.constant 0 : index
    %c0_107 = arith.constant 0 : index
    %331 = vector.load %arg10[%c0_106, %c0_107] : memref<8x1xf32, #tpu.memory_space<vmem>>, vector<8x1xf32>
    %332 = arith.addf %330, %331 : vector<8x1xf32>
    %333 = arith.negf %332 : vector<8x1xf32>
    %334 = math.exp %333 : vector<8x1xf32>
    %cst_108 = arith.constant 1.000000e+00 : f32
    %335 = vector.broadcast %cst_108 : f32 to vector<8x1xf32>
    %336 = arith.addf %335, %334 : vector<8x1xf32>
    %337 = arith.divf %335, %336 : vector<8x1xf32>
    %338 = vector.broadcast %337 : vector<8x1xf32> to vector<8x256xf32>
    %339 = arith.mulf %312, %338 : vector<8x256xf32>
    %c0_109 = arith.constant 0 : index
    %c0_110 = arith.constant 0 : index
    %c0_111 = arith.constant 0 : index
    %340 = vector.load %arg1[%c0_109, %c0_110, %c0_111] : memref<1x8x256xf32, #tpu.memory_space<vmem>>, vector<1x8x256xf32>
    %341 = vector.shape_cast %340 : vector<1x8x256xf32> to vector<8x256xf32>
    %342 = arith.addf %339, %341 : vector<8x256xf32>
    %c0_112 = arith.constant 0 : index
    %c0_113 = arith.constant 0 : index
    %c0_114 = arith.constant 0 : index
    %343 = vector.load %arg11[%c0_112, %c0_113, %c0_114] : memref<1x8x256xf32, #tpu.memory_space<vmem>>, vector<1x8x256xf32>
    %344 = vector.shape_cast %343 : vector<1x8x256xf32> to vector<8x256xf32>
    %345 = vector.shape_cast %342 : vector<8x256xf32> to vector<1x8x256xf32>
    tpu.vector_store %arg11[%c0_112, %c0_113, %c0_114], %345 {strides = array<i32>} : memref<1x8x256xf32, #tpu.memory_space<vmem>>, vector<1x8x256xf32>,
    return
  }
  func.func @transform_0(%arg0: i32) -> (i32, i32, i32) {
    %c0_i32 = arith.constant 0 : i32
    %c0_i32_0 = arith.constant 0 : i32
    %c0_i32_1 = arith.constant 0 : i32
    return %arg0, %c0_i32, %c0_i32_0 : i32, i32, i32
  }
  func.func @transform_1(%arg0: i32) -> (i32, i32) {
    %c0_i32 = arith.constant 0 : i32
    %c0_i32_0 = arith.constant 0 : i32
    %c0_i32_1 = arith.constant 0 : i32
    return %c0_i32, %c0_i32_0 : i32, i32
  }
  func.func @transform_2(%arg0: i32) -> (i32, i32, i32) {
    %c0_i32 = arith.constant 0 : i32
    %c0_i32_0 = arith.constant 0 : i32
    %c0_i32_1 = arith.constant 0 : i32
    %c0_i32_2 = arith.constant 0 : i32
    return %c0_i32, %c0_i32_0, %c0_i32_1 : i32, i32, i32
  }
  func.func @transform_3(%arg0: i32) -> (i32, i32) {
    %c0_i32 = arith.constant 0 : i32
    %c0_i32_0 = arith.constant 0 : i32
    %c0_i32_1 = arith.constant 0 : i32
    return %c0_i32, %c0_i32_0 : i32, i32
  }
  func.func @transform_4(%arg0: i32) -> (i32, i32, i32) {
    %c0_i32 = arith.constant 0 : i32
    %c0_i32_0 = arith.constant 0 : i32
    %c0_i32_1 = arith.constant 0 : i32
    %c0_i32_2 = arith.constant 0 : i32
    return %c0_i32, %c0_i32_0, %c0_i32_1 : i32, i32, i32
  }
  func.func @transform_5(%arg0: i32) -> (i32, i32) {
    %c0_i32 = arith.constant 0 : i32
    %c0_i32_0 = arith.constant 0 : i32
    %c0_i32_1 = arith.constant 0 : i32
    return %c0_i32, %c0_i32_0 : i32, i32
  }
  func.func @transform_6(%arg0: i32) -> (i32, i32) {
    %c0_i32 = arith.constant 0 : i32
    %c0_i32_0 = arith.constant 0 : i32
    %c0_i32_1 = arith.constant 0 : i32
    return %c0_i32, %c0_i32_0 : i32, i32
  }
  func.func @transform_7(%arg0: i32) -> (i32, i32) {
    %c0_i32 = arith.constant 0 : i32
    %c0_i32_0 = arith.constant 0 : i32
    %c0_i32_1 = arith.constant 0 : i32
    return %c0_i32, %c0_i32_0 : i32, i32
  }
  func.func @transform_8(%arg0: i32) -> (i32, i32) {
    %c0_i32 = arith.constant 0 : i32
    %c0_i32_0 = arith.constant 0 : i32
    %c0_i32_1 = arith.constant 0 : i32
    return %c0_i32, %c0_i32_0 : i32, i32
  }
  func.func @transform_9(%arg0: i32) -> (i32, i32) {
    %c0_i32 = arith.constant 0 : i32
    %c0_i32_0 = arith.constant 0 : i32
    %c0_i32_1 = arith.constant 0 : i32
    return %c0_i32, %c0_i32_0 : i32, i32
  }
  func.func @transform_10(%arg0: i32) -> (i32, i32, i32) {
    %c0_i32 = arith.constant 0 : i32
    %c0_i32_0 = arith.constant 0 : i32
    %c0_i32_1 = arith.constant 0 : i32
    return %arg0, %c0_i32, %c0_i32_0 : i32, i32, i32
  }
}

</mosaic_0001>

<llo_original>
// kernel: tpu_custom_call.1
$region0: #{tpu_custom_call.1}
  #allocation0 [shape = 'u32[]', space=smem, size = 0x4, offset = 0x4, fixed_abs, tag = 'smem constant byte address 0x4 - core index']
  #allocation1 [shape = 'u32[72,128]{1,0:T(1,128)}', space=vmem, size = 0x9000, scoped, tag = 'internal scratch']
  %s0 = inlined_call_operand.hbm [shape: f32[2,8,256], index: 0, kind: input, shape index: {}]
  %s1 = inlined_call_operand.vmem [shape: bf16[7,256], index: 1, kind: input, shape index: {}]
  %s2 = inlined_call_operand.vmem [shape: bf16[3,8,72], index: 2, kind: input, shape index: {}]
  %s3 = inlined_call_operand.vmem [shape: f32[8,1], index: 3, kind: input, shape index: {}]
  %s4 = inlined_call_operand.vmem [shape: bf16[3,8,72], index: 4, kind: input, shape index: {}]
  %s5 = inlined_call_operand.vmem [shape: f32[8,1], index: 5, kind: input, shape index: {}]
  %s6 = inlined_call_operand.vmem [shape: f32[8,2], index: 6, kind: input, shape index: {}]
  %s7 = inlined_call_operand.vmem [shape: f32[1,2], index: 7, kind: input, shape index: {}]
  %s8 = inlined_call_operand.vmem [shape: f32[8,2], index: 8, kind: input, shape index: {}]
  %s9 = inlined_call_operand.vmem [shape: f32[8,1], index: 9, kind: input, shape index: {}]
  %s10 = inlined_call_operand.hbm [shape: f32[2,8,256], index: 10, kind: output, shape index: {}]
  %s11 = sld [smem:[#allocation0]]
  $region77: #{tpu_custom_call.1} parent=0
    _
  %s13 = ssub.s32 1, %s11
  %s14 = scalar_select 0, %s13, %s11
  $region1: #{tpu_custom_call.1} parent=0
    #allocation2 [shape = 'u8[16384]{0}', space=vmem, size = 0x4000, scoped, tag = 'input window, operand 0']
    #allocation3 [shape = 's32[2]{0}', space=sflag, size = 0x8, scoped, tag = 'scoped memory for tpu_custom_call.1']
    #allocation4 [shape = 's32[2]{0}', space=sflag, size = 0x8, scoped, tag = 'scoped memory for tpu_custom_call.1']
    #allocation5 [shape = 'u8[16384]{0}', space=vmem, size = 0x4000, scoped, tag = 'output window, operand 0']
    %15 = vsyncpa [#allocation3], 0
    %s16 = scalar_lea.sflag [#allocation3], 1
    %17 = vsyncpa %s16, 0
    %18 = vsyncpa [#allocation4], 0
    %s19 = scalar_lea.sflag [#allocation4], 1
    %20 = vsyncpa %s19, 0
    loop: start=0, step=1, limit=4
    $region2: #{tpu_custom_call.1} parent=1 // loop_pre_header
      _
    $region3: #{tpu_custom_call.1} parent=1 // loop_header
      %s22 = sphi 0, %s26
      %p23 = scmp.ge.s32.totalorder %s22, 4
      %s32 = sphi 0, %s34
      %s35 = sphi 0, %s32
      %s36 = sphi 0, %s35
      %s52 = sphi 0, %s36
      %s56 = sphi 0, %s56
      %s58 = sphi 0, %s56
      %s59 = sphi 0, %s58
      %s73 = sphi 0, %s59
      %s77 = sphi 0, %s77
      %s79 = sphi 0, %s77
      %s80 = sphi 0, %s79
      %s94 = sphi 0, %s80
      %s98 = sphi 0, %s98
      %s100 = sphi 0, %s98
      %s101 = sphi 0, %s100
      %s115 = sphi 0, %s101
      %s119 = sphi 0, %s119
      %s121 = sphi 0, %s119
      %s122 = sphi 0, %s121
      %s136 = sphi 0, %s122
      %s140 = sphi 0, %s140
      %s142 = sphi 0, %s140
      %s143 = sphi 0, %s142
      %s157 = sphi 0, %s143
      %s161 = sphi 0, %s161
      %s163 = sphi 0, %s161
      %s164 = sphi 0, %s163
      %s178 = sphi 0, %s164
      %s182 = sphi 0, %s182
      %s184 = sphi 0, %s182
      %s185 = sphi 0, %s184
      %s199 = sphi 0, %s185
      %s203 = sphi 0, %s203
      %s205 = sphi 0, %s203
      %s206 = sphi 0, %s205
      %s220 = sphi 0, %s206
      %s224 = sphi 0, %s224
      %s226 = sphi 0, %s224
      %s227 = sphi 0, %s226
      %s241 = sphi 0, %s227
      %s247 = sphi 0, %s249
      %s250 = sphi 0, %s247
      %s251 = sphi 0, %s250
      %s267 = sphi 0, %s251
    $region4: #{tpu_custom_call.1} parent=1 // loop_header_branch
      %25 = sbr.rel (%p23) target = $region8
    $region5: #{tpu_custom_call.1} parent=1 // loop_body
      %s27 = ssub.s32 %s22, 1
      %s28 = ssub.s32 %s22, 2
      %s29 = sadd.s32 %s22, 1
      %s30 = ssub.s32 %s22, %s29
      %p31 = scmp.eq.s32.totalorder %s30, 0
      %s33 = sadd.s32 %s32, 1
      %s34 = scalar_select %p31, %s32, %s33
      %p37 = pneg %p31
      %p38 = scmp.eq.s32.totalorder %s22, 1
      %p39 = por %p37, %p38
      %p40 = scmp.ne.s32.totalorder %s32, %s35
      %p41 = scmp.eq.s32.totalorder %s22, 0
      %p42 = por %p40, %p41
      %p43 = scmp.ne.s32.totalorder %s32, %s35
      %p44 = scmp.eq.s32.totalorder %s27, 1
      %p45 = por %p43, %p44
      %p46 = scmp.ne.s32.totalorder %s35, %s36
      %p47 = scmp.eq.s32.totalorder %s27, 0
      %p48 = por %p46, %p47
      %p49 = scmp.ne.s32.totalorder %s35, %s36
      %p50 = scmp.eq.s32.totalorder %s28, 1
      %p51 = por %p49, %p50
      %p53 = scmp.ne.s32.totalorder %s36, %s52
      %p54 = scmp.eq.s32.totalorder %s28, 0
      %p55 = por %p53, %p54
      %s57 = sadd.s32 %s56, 1
      %p60 = scmp.eq.s32.totalorder %s22, 1
      %p61 = scmp.ne.s32.totalorder %s56, %s58
      %p62 = scmp.eq.s32.totalorder %s22, 0
      %p63 = por %p61, %p62
      %p64 = scmp.ne.s32.totalorder %s56, %s58
      %p65 = scmp.eq.s32.totalorder %s27, 1
      %p66 = por %p64, %p65
      %p67 = scmp.ne.s32.totalorder %s58, %s59
      %p68 = scmp.eq.s32.totalorder %s27, 0
      %p69 = por %p67, %p68
      %p70 = scmp.ne.s32.totalorder %s58, %s59
      %p71 = scmp.eq.s32.totalorder %s28, 1
      %p72 = por %p70, %p71
      %p74 = scmp.ne.s32.totalorder %s59, %s73
      %p75 = scmp.eq.s32.totalorder %s28, 0
      %p76 = por %p74, %p75
      %s78 = sadd.s32 %s77, 1
      %p81 = scmp.eq.s32.totalorder %s22, 1
      %p82 = scmp.ne.s32.totalorder %s77, %s79
      %p83 = scmp.eq.s32.totalorder %s22, 0
      %p84 = por %p82, %p83
      %p85 = scmp.ne.s32.totalorder %s77, %s79
      %p86 = scmp.eq.s32.totalorder %s27, 1
      %p87 = por %p85, %p86
      %p88 = scmp.ne.s32.totalorder %s79, %s80
      %p89 = scmp.eq.s32.totalorder %s27, 0
      %p90 = por %p88, %p89
      %p91 = scmp.ne.s32.totalorder %s79, %s80
      %p92 = scmp.eq.s32.totalorder %s28, 1
      %p93 = por %p91, %p92
      %p95 = scmp.ne.s32.totalorder %s80, %s94
      %p96 = scmp.eq.s32.totalorder %s28, 0
      %p97 = por %p95, %p96
      %s99 = sadd.s32 %s98, 1
      %p102 = scmp.eq.s32.totalorder %s22, 1
      %p103 = scmp.ne.s32.totalorder %s98, %s100
      %p104 = scmp.eq.s32.totalorder %s22, 0
      %p105 = por %p103, %p104
      %p106 = scmp.ne.s32.totalorder %s98, %s100
      %p107 = scmp.eq.s32.totalorder %s27, 1
      %p108 = por %p106, %p107
      %p109 = scmp.ne.s32.totalorder %s100, %s101
      %p110 = scmp.eq.s32.totalorder %s27, 0
      %p111 = por %p109, %p110
      %p112 = scmp.ne.s32.totalorder %s100, %s101
      %p113 = scmp.eq.s32.totalorder %s28, 1
      %p114 = por %p112, %p113
      %p116 = scmp.ne.s32.totalorder %s101, %s115
      %p117 = scmp.eq.s32.totalorder %s28, 0
      %p118 = por %p116, %p117
      %s120 = sadd.s32 %s119, 1
      %p123 = scmp.eq.s32.totalorder %s22, 1
      %p124 = scmp.ne.s32.totalorder %s119, %s121
      %p125 = scmp.eq.s32.totalorder %s22, 0
      %p126 = por %p124, %p125
      %p127 = scmp.ne.s32.totalorder %s119, %s121
      %p128 = scmp.eq.s32.totalorder %s27, 1
      %p129 = por %p127, %p128
      %p130 = scmp.ne.s32.totalorder %s121, %s122
      %p131 = scmp.eq.s32.totalorder %s27, 0
      %p132 = por %p130, %p131
      %p133 = scmp.ne.s32.totalorder %s121, %s122
      %p134 = scmp.eq.s32.totalorder %s28, 1
      %p135 = por %p133, %p134
      %p137 = scmp.ne.s32.totalorder %s122, %s136
      %p138 = scmp.eq.s32.totalorder %s28, 0
      %p139 = por %p137, %p138
      %s141 = sadd.s32 %s140, 1
      %p144 = scmp.eq.s32.totalorder %s22, 1
      %p145 = scmp.ne.s32.totalorder %s140, %s142
      %p146 = scmp.eq.s32.totalorder %s22, 0
      %p147 = por %p145, %p146
      %p148 = scmp.ne.s32.totalorder %s140, %s142
      %p149 = scmp.eq.s32.totalorder %s27, 1
      %p150 = por %p148, %p149
      %p151 = scmp.ne.s32.totalorder %s142, %s143
      %p152 = scmp.eq.s32.totalorder %s27, 0
      %p153 = por %p151, %p152
      %p154 = scmp.ne.s32.totalorder %s142, %s143
      %p155 = scmp.eq.s32.totalorder %s28, 1
      %p156 = por %p154, %p155
      %p158 = scmp.ne.s32.totalorder %s143, %s157
      %p159 = scmp.eq.s32.totalorder %s28, 0
      %p160 = por %p158, %p159
      %s162 = sadd.s32 %s161, 1
      %p165 = scmp.eq.s32.totalorder %s22, 1
      %p166 = scmp.ne.s32.totalorder %s161, %s163
      %p167 = scmp.eq.s32.totalorder %s22, 0
      %p168 = por %p166, %p167
      %p169 = scmp.ne.s32.totalorder %s161, %s163
      %p170 = scmp.eq.s32.totalorder %s27, 1
      %p171 = por %p169, %p170
      %p172 = scmp.ne.s32.totalorder %s163, %s164
      %p173 = scmp.eq.s32.totalorder %s27, 0
      %p174 = por %p172, %p173
      %p175 = scmp.ne.s32.totalorder %s163, %s164
      %p176 = scmp.eq.s32.totalorder %s28, 1
      %p177 = por %p175, %p176
      %p179 = scmp.ne.s32.totalorder %s164, %s178
      %p180 = scmp.eq.s32.totalorder %s28, 0
      %p181 = por %p179, %p180
      %s183 = sadd.s32 %s182, 1
      %p186 = scmp.eq.s32.totalorder %s22, 1
      %p187 = scmp.ne.s32.totalorder %s182, %s184
      %p188 = scmp.eq.s32.totalorder %s22, 0
      %p189 = por %p187, %p188
      %p190 = scmp.ne.s32.totalorder %s182, %s184
      %p191 = scmp.eq.s32.totalorder %s27, 1
      %p192 = por %p190, %p191
      %p193 = scmp.ne.s32.totalorder %s184, %s185
      %p194 = scmp.eq.s32.totalorder %s27, 0
      %p195 = por %p193, %p194
      %p196 = scmp.ne.s32.totalorder %s184, %s185
      %p197 = scmp.eq.s32.totalorder %s28, 1
      %p198 = por %p196, %p197
      %p200 = scmp.ne.s32.totalorder %s185, %s199
      %p201 = scmp.eq.s32.totalorder %s28, 0
      %p202 = por %p200, %p201
      %s204 = sadd.s32 %s203, 1
      %p207 = scmp.eq.s32.totalorder %s22, 1
      %p208 = scmp.ne.s32.totalorder %s203, %s205
      %p209 = scmp.eq.s32.totalorder %s22, 0
      %p210 = por %p208, %p209
      %p211 = scmp.ne.s32.totalorder %s203, %s205
      %p212 = scmp.eq.s32.totalorder %s27, 1
      %p213 = por %p211, %p212
      %p214 = scmp.ne.s32.totalorder %s205, %s206
      %p215 = scmp.eq.s32.totalorder %s27, 0
      %p216 = por %p214, %p215
      %p217 = scmp.ne.s32.totalorder %s205, %s206
      %p218 = scmp.eq.s32.totalorder %s28, 1
      %p219 = por %p217, %p218
      %p221 = scmp.ne.s32.totalorder %s206, %s220
      %p222 = scmp.eq.s32.totalorder %s28, 0
      %p223 = por %p221, %p222
      %s225 = sadd.s32 %s224, 1
      %p228 = scmp.eq.s32.totalorder %s22, 1
      %p229 = scmp.ne.s32.totalorder %s224, %s226
      %p230 = scmp.eq.s32.totalorder %s22, 0
      %p231 = por %p229, %p230
      %p232 = scmp.ne.s32.totalorder %s224, %s226
      %p233 = scmp.eq.s32.totalorder %s27, 1
      %p234 = por %p232, %p233
      %p235 = scmp.ne.s32.totalorder %s226, %s227
      %p236 = scmp.eq.s32.totalorder %s27, 0
      %p237 = por %p235, %p236
      %p238 = scmp.ne.s32.totalorder %s226, %s227
      %p239 = scmp.eq.s32.totalorder %s28, 1
      %p240 = por %p238, %p239
      %p242 = scmp.ne.s32.totalorder %s227, %s241
      %p243 = scmp.eq.s32.totalorder %s28, 0
      %p244 = por %p242, %p243
      %s245 = ssub.s32 %s22, %s29
      %p246 = scmp.eq.s32.totalorder %s245, 0
      %s248 = sadd.s32 %s247, 1
      %s249 = scalar_select %p246, %s247, %s248
      %p252 = pneg %p246
      %p253 = scmp.eq.s32.totalorder %s22, 1
      %p254 = por %p252, %p253
      %p255 = scmp.ne.s32.totalorder %s247, %s250
      %p256 = scmp.eq.s32.totalorder %s22, 0
      %p257 = por %p255, %p256
      %p258 = scmp.ne.s32.totalorder %s247, %s250
      %p259 = scmp.eq.s32.totalorder %s27, 1
      %p260 = por %p258, %p259
      %p261 = scmp.ne.s32.totalorder %s250, %s251
      %p262 = scmp.eq.s32.totalorder %s27, 0
      %p263 = por %p261, %p262
      %p264 = scmp.ne.s32.totalorder %s250, %s251
      %p265 = scmp.eq.s32.totalorder %s28, 1
      %p266 = por %p264, %p265
      %p268 = scmp.ne.s32.totalorder %s251, %s267
      %p269 = scmp.eq.s32.totalorder %s28, 0
      %p270 = por %p268, %p269
      %p271 = scmp.le.s32.totalorder 1, %s22
      %p272 = scmp.lt.s32.totalorder %s22, 3
      %p273 = pnand %p271, %p272
      %p274 = pneg %p273
      // Predicated region
      $region9: #{tpu_custom_call.1} parent=5 // pred_check
        _
      $region10: #{tpu_custom_call.1} parent=5 // pred_check_branch
        %276 = sbr.rel (%p273) target = $region12
      $region11: #{tpu_custom_call.1} parent=5 // pred_region
        %s277 = ssub.s32 %s22, 1
        // Predicated region
        $region13: #{tpu_custom_call.1} parent=11 // pred_check
          %p278 = pneg %p69
        $region14: #{tpu_custom_call.1} parent=11 // pred_check_branch
          %280 = sbr.rel (%p278) target = $region16
        $region15: #{tpu_custom_call.1} parent=11 // pred_region
          _
        $region16: #{tpu_custom_call.1} parent=11 // pred_fallthru
          _
        // Predicated region
        $region17: #{tpu_custom_call.1} parent=11 // pred_check
          %p281 = pneg %p90
        $region18: #{tpu_custom_call.1} parent=11 // pred_check_branch
          %283 = sbr.rel (%p281) target = $region20
        $region19: #{tpu_custom_call.1} parent=11 // pred_region
          _
        $region20: #{tpu_custom_call.1} parent=11 // pred_fallthru
          _
        // Predicated region
        $region21: #{tpu_custom_call.1} parent=11 // pred_check
          %p284 = pneg %p111
        $region22: #{tpu_custom_call.1} parent=11 // pred_check_branch
          %286 = sbr.rel (%p284) target = $region24
        $region23: #{tpu_custom_call.1} parent=11 // pred_region
          _
        $region24: #{tpu_custom_call.1} parent=11 // pred_fallthru
          _
        // Predicated region
        $region25: #{tpu_custom_call.1} parent=11 // pred_check
          %p287 = pneg %p132
        $region26: #{tpu_custom_call.1} parent=11 // pred_check_branch
          %289 = sbr.rel (%p287) target = $region28
        $region27: #{tpu_custom_call.1} parent=11 // pred_region
          _
        $region28: #{tpu_custom_call.1} parent=11 // pred_fallthru
          _
        // Predicated region
        $region29: #{tpu_custom_call.1} parent=11 // pred_check
          %p290 = pneg %p153
        $region30: #{tpu_custom_call.1} parent=11 // pred_check_branch
          %292 = sbr.rel (%p290) target = $region32
        $region31: #{tpu_custom_call.1} parent=11 // pred_region
          _
        $region32: #{tpu_custom_call.1} parent=11 // pred_fallthru
          _
        // Predicated region
        $region33: #{tpu_custom_call.1} parent=11 // pred_check
          %p293 = pneg %p174
        $region34: #{tpu_custom_call.1} parent=11 // pred_check_branch
          %295 = sbr.rel (%p293) target = $region36
        $region35: #{tpu_custom_call.1} parent=11 // pred_region
          _
        $region36: #{tpu_custom_call.1} parent=11 // pred_fallthru
          _
        // Predicated region
        $region37: #{tpu_custom_call.1} parent=11 // pred_check
          %p296 = pneg %p195
        $region38: #{tpu_custom_call.1} parent=11 // pred_check_branch
          %298 = sbr.rel (%p296) target = $region40
        $region39: #{tpu_custom_call.1} parent=11 // pred_region
          _
        $region40: #{tpu_custom_call.1} parent=11 // pred_fallthru
          _
        // Predicated region
        $region41: #{tpu_custom_call.1} parent=11 // pred_check
          %p299 = pneg %p216
        $region42: #{tpu_custom_call.1} parent=11 // pred_check_branch
          %301 = sbr.rel (%p299) target = $region44
        $region43: #{tpu_custom_call.1} parent=11 // pred_region
          _
        $region44: #{tpu_custom_call.1} parent=11 // pred_fallthru
          _
        // Predicated region
        $region45: #{tpu_custom_call.1} parent=11 // pred_check
          %p302 = pneg %p237
        $region46: #{tpu_custom_call.1} parent=11 // pred_check_branch
          %304 = sbr.rel (%p302) target = $region48
        $region47: #{tpu_custom_call.1} parent=11 // pred_region
          _
        $region48: #{tpu_custom_call.1} parent=11 // pred_fallthru
          _
      $region12: #{tpu_custom_call.1} parent=5 // pred_fallthru
        _
      %p305 = scmp.lt.s32.totalorder %s22, 2
      // Predicated region
      $region49: #{tpu_custom_call.1} parent=5 // pred_check
        %p306 = pneg %p305
      $region50: #{tpu_custom_call.1} parent=5 // pred_check_branch
        %308 = sbr.rel (%p306) target = $region52
      $region51: #{tpu_custom_call.1} parent=5 // pred_region
        // Predicated region
        $region53: #{tpu_custom_call.1} parent=51 // pred_check
          %p309 = pneg %p42
        $region54: #{tpu_custom_call.1} parent=51 // pred_check_branch
          %311 = sbr.rel (%p309) target = $region56
        $region55: #{tpu_custom_call.1} parent=51 // pred_region
          %s312 = sand.u32 %s32, 1
          %s313 = scalar_lea.sflag [#allocation3], %s312
          %s314 = sand.u32 %s32, 1
          %s315 = smul.addr %s314, 16
          %s316 = scalar_lea.vmem [#allocation2], %s315
          %318 = vsyncadd %s313, 0
          %s319 = smul.addr %s22, 2
          %s320 = smul.addr %s319, 8
          %s321 = scalar_lea.hbm %s0, %s320
          %s323 = sshll.u32 %s321, 4
          %s324 = int_to_ptr.hbm [resolvable:$true] %s323
          %s325 = sshll.u32 %s316, 4
          %s326 = int_to_ptr.vmem [resolvable:$true] %s325
          %328 = dma.hbm_to_vmem [thread:$0]  %s324, 256, %s326, %s313
        $region56: #{tpu_custom_call.1} parent=51 // pred_fallthru
          _
      $region52: #{tpu_custom_call.1} parent=5 // pred_fallthru
        _
      %p329 = scmp.le.s32.totalorder 1, %s22
      %p330 = scmp.lt.s32.totalorder %s22, 3
      %p331 = pnand %p329, %p330
      %p332 = pneg %p331
      // Predicated region
      $region57: #{tpu_custom_call.1} parent=5 // pred_check
        _
      $region58: #{tpu_custom_call.1} parent=5 // pred_check_branch
        %334 = sbr.rel (%p331) target = $region60
      $region59: #{tpu_custom_call.1} parent=5 // pred_region
        %s335 = ssub.s32 %s22, 1
        %s336 = sand.u32 %s35, 1
        %s337 = scalar_lea.sflag [#allocation3], %s336
        %s338 = sand.u32 %s35, 1
        %s339 = smul.addr %s338, 16
        %s340 = scalar_lea.vmem [#allocation2], %s339
        // Predicated region
        $region61: #{tpu_custom_call.1} parent=59 // pred_check
          %p341 = pneg %p48
        $region62: #{tpu_custom_call.1} parent=59 // pred_check_branch
          %343 = sbr.rel (%p341) target = $region64
        $region63: #{tpu_custom_call.1} parent=59 // pred_region
          %345 = dma.done %s337, 256
        $region64: #{tpu_custom_call.1} parent=59 // pred_fallthru
          _
        %s346 = sand.u32 %s35, 1
        %s347 = scalar_lea.sflag [#allocation3], %s346
        %s348 = sand.u32 %s35, 1
        %s349 = smul.addr %s348, 16
        %s350 = scalar_lea.vmem [#allocation2], %s349
        %p351 = pneg %p48
        %p352 = pneg %p45
        %p353 = pneg %p69
        %p354 = pneg %p66
        %p355 = pneg %p90
        %p356 = pneg %p87
        %p357 = pneg %p111
        %p358 = pneg %p108
        %p359 = pneg %p132
        %p360 = pneg %p129
        %p361 = pneg %p153
        %p362 = pneg %p150
        %p363 = pneg %p174
        %p364 = pneg %p171
        %p365 = pneg %p195
        %p366 = pneg %p192
        %p367 = pneg %p216
        %p368 = pneg %p213
        %p369 = pneg %p237
        %p370 = pneg %p234
        %p371 = pneg %p263
        %p372 = pneg %p260
        %s373 = sand.u32 %s250, 1
        %s374 = scalar_lea.sflag [#allocation4], %s373
        %s375 = sand.u32 %s250, 1
        %s376 = smul.addr %s375, 16
        %s377 = scalar_lea.vmem [#allocation5], %s376
        %v379 = vld [vmem:[%s1] sm:$0x11]
        %v380 = vld [vmem:[%s1] sm:$0x22]
        %v381 = vld [vmem:[%s1] sm:$0x44]
        %v382 = vld [vmem:[%s1] sm:$0x88]
        %v383 = vld [vmem:[%s340] sm:$0xff]
        %v384 = vld [vmem:[%s340 + $0x8] sm:$0xff]
        %v385 = vadd.f32 %v383, %v384
        %386 = vadd.xlane.f32.xlu0 %v385
        %v387 = vpop.xlane.xlu0 %386
        %v388 = vmul.f32 %v387, 0.0052083335
        %v389 = vsub.f32 %v383, %v388
        %v390 = vsub.f32 %v384, %v388
        %v391 = vunpack.c.l.bf16 %v382
        %v392 = vunpack.c.h.bf16 %v382
        %v393 = vperm.slane %v391, 6
        %v394 = vperm.slane %v392, 6
        %v395 = vmul.f32 %v389, %v393
        %v396 = vmul.f32 %v390, %v394
        %v397 = vmul.f32 %v395, %v395
        %v398 = vmul.f32 %v396, %v396
        %v399 = vadd.f32 %v397, %v398
        %400 = vadd.xlane.f32.xlu0 %v399
        %v401 = vpop.xlane.xlu0 %400
        %v402 = vmul.f32 %v401, 0.0052083335
        %v403 = vadd.f32 %v402, 1e-05
        %v404 = vrsqrt.pop %v403
        %v405 = vmul.f32 %v404, %v403
        %v406 = vmul.f32 %v405, %v404
        %v407 = vmul.f32 0.5, %v406
        %v408 = vsub.f32 1.5, %v407
        %v409 = vmul.f32 %v404, %v408
        %vm410 = vweird.f32 %v403
        %vm411 = vweird.f32 %v404
        %vm412 = vmor %vm410, %vm411
        %v413 = vsel %vm412, %v404, %v409
        %v414 = vmul.f32 %v395, %v413
        %v415 = vmul.f32 %v396, %v413
        %v416 = vxor.u32 %v414, 2147483648
        %v417 = vxor.u32 %v415, 2147483648
        %v418 = vmul.f32 %v416, 1.442695
        %v419 = vpow.pop %v418
        %v420 = vmul.f32 %v417, 1.442695
        %v421 = vpow.pop %v420
        %v422 = vadd.f32 %v419, 1.0
        %v423 = vadd.f32 %v421, 1.0
        %v424 = vrcp.pop %v422
        %v425 = vmul.f32 %v422, %v424
        %v426 = vsub.f32 1.0, %v425
        %v427 = vmul.f32 %v424, %v426
        %v428 = vadd.f32 %v424, %v427
        %vm429 = vweird.f32 %v422
        %vm430 = vweird.f32 %v424
        %vm431 = vmor %vm429, %vm430
        %v432 = vsel %vm431, %v424, %v428
        %v433 = vand.u32 2147483647, %v422
        %vm434 = vcmp.eq.f32.partialorder %v433, 8.507059e+37
        %v435 = vand.u32 %v422, 2147483648
        %v436 = vor.u32 1.1754944e-38, %v435
        %v437 = vsel %vm434, %v436, %v432
        %v438 = vmul.f32 1.0, %v437
        %v439 = vrcp.pop %v423
        %v440 = vmul.f32 %v423, %v439
        %v441 = vsub.f32 1.0, %v440
        %v442 = vmul.f32 %v439, %v441
        %v443 = vadd.f32 %v439, %v442
        %vm444 = vweird.f32 %v423
        %vm445 = vweird.f32 %v439
        %vm446 = vmor %vm444, %vm445
        %v447 = vsel %vm446, %v439, %v443
        %v448 = vand.u32 2147483647, %v423
        %vm449 = vcmp.eq.f32.partialorder %v448, 8.507059e+37
        %v450 = vand.u32 %v423, 2147483648
        %v451 = vor.u32 1.1754944e-38, %v450
        %v452 = vsel %vm449, %v451, %v447
        %v453 = vmul.f32 1.0, %v452
        %v454 = vmul.f32 %v414, %v438
        %v455 = vmul.f32 %v415, %v453
        %456 = vrot.lane.b32.xlu0 %v454, 48
        %v457 = vpop.permute.xlu0 %456
        %458 = vrot.lane.b32.xlu0 %v455, 48
        %v459 = vpop.permute.xlu0 %458
        %v460 = vlaneseq
        %v461 = vand.u32 %v460, 127
        %vm462 = vcmp.lt.s32.totalorder %v461, 48
        %v463 = vsel %vm462, %v457, %v459
        %v464 = vsel %vm462, %v459, %v457
        %v465 = vunpack.c.l.bf16 %v379
        %v466 = vunpack.c.h.bf16 %v379
        %v467 = vperm.slane %v465, 0
        %v468 = vperm.slane %v466, 0
        %v469 = vmul.f32 %v464, %v467
        %v470 = vmul.f32 %v463, %v468
        %471 = vrot.lane.b32.xlu0 %v469, 8
        %v472 = vpop.permute.xlu0 %471
        %473 = vrot.lane.b32.xlu0 %v470, 8
        %v474 = vpop.permute.xlu0 %473
        %vm475 = vcmp.lt.s32.totalorder %v461, 8
        %v476 = vsel %vm475, %v472, %v474
        %v477 = vsel %vm475, %v474, %v472
        %v478 = vunpack.c.l.bf16 %v380
        %v479 = vunpack.c.h.bf16 %v380
        %v480 = vperm.slane %v478, 2
        %v481 = vperm.slane %v479, 2
        %v482 = vmul.f32 %v477, %v480
        %v483 = vmul.f32 %v476, %v481
        %484 = vrot.lane.b32.xlu0 %v482, 1
        %v485 = vpop.permute.xlu0 %484
        %486 = vrot.lane.b32.xlu0 %v483, 1
        %v487 = vpop.permute.xlu0 %486
        %vm488 = vcmp.lt.s32.totalorder %v461, 1
        %v489 = vsel %vm488, %v485, %v487
        %v490 = vsel %vm488, %v487, %v485
        %v491 = vunpack.c.l.bf16 %v381
        %v492 = vunpack.c.h.bf16 %v381
        %v493 = vperm.slane %v491, 4
        %v494 = vperm.slane %v492, 4
        %v495 = vmul.f32 %v490, %v493
        %v496 = vmul.f32 %v489, %v494
        %497 = vrot.lane.b32.xlu0 %v482, 127
        %v498 = vpop.permute.xlu0 %497
        %499 = vrot.lane.b32.xlu0 %v483, 127
        %v500 = vpop.permute.xlu0 %499
        %vm501 = vcmp.lt.s32.totalorder %v461, 127
        %v502 = vsel %vm501, %v498, %v500
        %v503 = vsel %vm501, %v500, %v498
        %v504 = vperm.slane %v491, 5
        %v505 = vperm.slane %v492, 5
        %v506 = vmul.f32 %v502, %v504
        %v507 = vmul.f32 %v503, %v505
        %508 = vrot.lane.b32.xlu0 %v469, 1
        %v509 = vpop.permute.xlu0 %508
        %510 = vrot.lane.b32.xlu0 %v470, 1
        %v511 = vpop.permute.xlu0 %510
        %v512 = vsel %vm488, %v509, %v511
        %v513 = vsel %vm488, %v511, %v509
        %v514 = vmul.f32 %v513, %v493
        %v515 = vmul.f32 %v512, %v494
        %516 = vrot.lane.b32.xlu0 %v469, 127
        %v517 = vpop.permute.xlu0 %516
        %518 = vrot.lane.b32.xlu0 %v470, 127
        %v519 = vpop.permute.xlu0 %518
        %v520 = vsel %vm501, %v517, %v519
        %v521 = vsel %vm501, %v519, %v517
        %v522 = vmul.f32 %v520, %v504
        %v523 = vmul.f32 %v521, %v505
        %524 = vrot.lane.b32.xlu0 %v469, 120
        %v525 = vpop.permute.xlu0 %524
        %526 = vrot.lane.b32.xlu0 %v470, 120
        %v527 = vpop.permute.xlu0 %526
        %vm528 = vcmp.lt.s32.totalorder %v461, 120
        %v529 = vsel %vm528, %v525, %v527
        %v530 = vsel %vm528, %v527, %v525
        %v531 = vperm.slane %v478, 3
        %v532 = vperm.slane %v479, 3
        %v533 = vmul.f32 %v529, %v531
        %v534 = vmul.f32 %v530, %v532
        %535 = vrot.lane.b32.xlu0 %v533, 1
        %v536 = vpop.permute.xlu0 %535
        %537 = vrot.lane.b32.xlu0 %v534, 1
        %v538 = vpop.permute.xlu0 %537
        %v539 = vsel %vm488, %v536, %v538
        %v540 = vsel %vm488, %v538, %v536
        %v541 = vmul.f32 %v540, %v493
        %v542 = vmul.f32 %v539, %v494
        %543 = vrot.lane.b32.xlu0 %v533, 127
        %v544 = vpop.permute.xlu0 %543
        %545 = vrot.lane.b32.xlu0 %v534, 127
        %v546 = vpop.permute.xlu0 %545
        %v547 = vsel %vm501, %v544, %v546
        %v548 = vsel %vm501, %v546, %v544
        %v549 = vmul.f32 %v547, %v504
        %v550 = vmul.f32 %v548, %v505
        %v551 = vpack.c.bf16 %v482, %v495
        %v552 = vpack.c.bf16 %v483, %v496
        %v553 = vpack.c.bf16 %v514, %v506
        %v554 = vpack.c.bf16 %v515, %v507
        %v555 = vpack.c.bf16 %v522, %v469
        %v556 = vpack.c.bf16 %v523, %v470
        %v557 = vpack.c.bf16 %v533, %v541
        %v558 = vpack.c.bf16 %v534, %v542
        %v559 = vpack.c.bf16 %v549, %v549
        %v560 = vpack.c.bf16 %v550, %v550
        %v561 = vld [vmem:[%s2] sm:$0xf]
        %562 = vrot.lane.b32.xlu0 %v454, 8
        %v563 = vpop.permute.xlu0 %562
        %564 = vrot.lane.b32.xlu0 %v455, 8
        %v565 = vpop.permute.xlu0 %564
        %v566 = vsel %vm475, %v563, %v565
        %v567 = vsel %vm475, %v565, %v563
        %v568 = vmul.f32 %v567, %v480
        %v569 = vmul.f32 %v566, %v481
        %570 = vrot.lane.b32.xlu0 %v568, 1
        %v571 = vpop.permute.xlu0 %570
        %572 = vrot.lane.b32.xlu0 %v569, 1
        %v573 = vpop.permute.xlu0 %572
        %v574 = vsel %vm488, %v571, %v573
        %v575 = vsel %vm488, %v573, %v571
        %v576 = vmul.f32 %v575, %v493
        %v577 = vmul.f32 %v574, %v494
        %578 = vrot.lane.b32.xlu0 %v568, 127
        %v579 = vpop.permute.xlu0 %578
        %580 = vrot.lane.b32.xlu0 %v569, 127
        %v581 = vpop.permute.xlu0 %580
        %v582 = vsel %vm501, %v579, %v581
        %v583 = vsel %vm501, %v581, %v579
        %v584 = vmul.f32 %v582, %v504
        %v585 = vmul.f32 %v583, %v505
        %586 = vrot.lane.b32.xlu0 %v454, 1
        %v587 = vpop.permute.xlu0 %586
        %588 = vrot.lane.b32.xlu0 %v455, 1
        %v589 = vpop.permute.xlu0 %588
        %v590 = vsel %vm488, %v587, %v589
        %v591 = vsel %vm488, %v589, %v587
        %v592 = vmul.f32 %v591, %v493
        %v593 = vmul.f32 %v590, %v494
        %594 = vrot.lane.b32.xlu0 %v454, 127
        %v595 = vpop.permute.xlu0 %594
        %596 = vrot.lane.b32.xlu0 %v455, 127
        %v597 = vpop.permute.xlu0 %596
        %v598 = vsel %vm501, %v595, %v597
        %v599 = vsel %vm501, %v597, %v595
        %v600 = vmul.f32 %v598, %v504
        %v601 = vmul.f32 %v599, %v505
        %602 = vrot.lane.b32.xlu0 %v454, 120
        %v603 = vpop.permute.xlu0 %602
        %604 = vrot.lane.b32.xlu0 %v455, 120
        %v605 = vpop.permute.xlu0 %604
        %v606 = vsel %vm528, %v603, %v605
        %v607 = vsel %vm528, %v605, %v603
        %v608 = vmul.f32 %v606, %v531
        %v609 = vmul.f32 %v607, %v532
        %610 = vrot.lane.b32.xlu0 %v608, 1
        %v611 = vpop.permute.xlu0 %610
        %612 = vrot.lane.b32.xlu0 %v609, 1
        %v613 = vpop.permute.xlu0 %612
        %v614 = vsel %vm488, %v611, %v613
        %v615 = vsel %vm488, %v613, %v611
        %v616 = vmul.f32 %v615, %v493
        %v617 = vmul.f32 %v614, %v494
        %618 = vrot.lane.b32.xlu0 %v608, 127
        %v619 = vpop.permute.xlu0 %618
        %620 = vrot.lane.b32.xlu0 %v609, 127
        %v621 = vpop.permute.xlu0 %620
        %v622 = vsel %vm501, %v619, %v621
        %v623 = vsel %vm501, %v621, %v619
        %v624 = vmul.f32 %v622, %v504
        %v625 = vmul.f32 %v623, %v505
        %v626 = vpack.c.bf16 %v568, %v576
        %v627 = vpack.c.bf16 %v569, %v577
        %v628 = vpack.c.bf16 %v592, %v584
        %v629 = vpack.c.bf16 %v593, %v585
        %v630 = vpack.c.bf16 %v600, %v454
        %v631 = vpack.c.bf16 %v601, %v455
        %v632 = vpack.c.bf16 %v608, %v616
        %v633 = vpack.c.bf16 %v609, %v617
        %v634 = vpack.c.bf16 %v624, %v624
        %v635 = vpack.c.bf16 %v625, %v625
        %s636 = scalar_lea.vmem %s2, 4
        %v637 = vld [vmem:[%s636] sm:$0xf]
        %vm638 = vcmask 588800
        %v640 = vsel %vm638, %v637, 0
        %vm642 = vcmask 1043456
        %v644 = vsel %vm642, %v634, 0
        %v647 = vsel %vm642, %v635, 0
        %649 = vmatpush.bf16.msra.mxu0 0
        %650 = vmatpush.bf16.msra.mxu0 0
        %651 = vmatpush.bf16.msra.mxu0 0
        %652 = vmatpush.bf16.msra.mxu0 %v644
        %653 = vmatpush.bf16.msra.mxu0 %v632
        %654 = vmatpush.bf16.msra.mxu0 %v630
        %655 = vmatpush.bf16.msra.mxu0 %v628
        %656 = vmatpush.bf16.msra.mxu0 %v626
        %657 = vmatmul.bf16.gmra.mxu0 %v640
        %v658 = vpop.f32.mrf.mxu0
        %v659 = vadd.f32 0.0, %v658
        %v660 = vpop.f32.mrf.mxu0
        %661 = vdwg.mxu0
        %662 = vmatpush.bf16.msra.mxu0 0
        %663 = vmatpush.bf16.msra.mxu0 0
        %664 = vmatpush.bf16.msra.mxu0 0
        %665 = vmatpush.bf16.msra.mxu0 %v647
        %666 = vmatpush.bf16.msra.mxu0 %v633
        %667 = vmatpush.bf16.msra.mxu0 %v631
        %668 = vmatpush.bf16.msra.mxu0 %v629
        %669 = vmatpush.bf16.msra.mxu0 %v627
        %670 = vmatmul.bf16.gmra.mxu0 %v640
        %v671 = vpop.f32.mrf.mxu0
        %v672 = vadd.f32 0.0, %v671
        %v673 = vpop.f32.mrf.mxu0
        %674 = vdwg.mxu0
        %v676 = vsel %vm638, %v561, 0
        %v679 = vsel %vm642, %v559, 0
        %v682 = vsel %vm642, %v560, 0
        %684 = vmatpush.bf16.msra.mxu0 0
        %685 = vmatpush.bf16.msra.mxu0 0
        %686 = vmatpush.bf16.msra.mxu0 0
        %687 = vmatpush.bf16.msra.mxu0 %v679
        %688 = vmatpush.bf16.msra.mxu0 %v557
        %689 = vmatpush.bf16.msra.mxu0 %v555
        %690 = vmatpush.bf16.msra.mxu0 %v553
        %691 = vmatpush.bf16.msra.mxu0 %v551
        %692 = vmatmul.bf16.gmra.mxu0 %v676
        %v693 = vpop.f32.mrf.mxu0
        %v694 = vadd.f32 %v659, %v693
        %v695 = vpop.f32.mrf.mxu0
        %696 = vdwg.mxu0
        %697 = vmatpush.bf16.msra.mxu0 0
        %698 = vmatpush.bf16.msra.mxu0 0
        %699 = vmatpush.bf16.msra.mxu0 0
        %700 = vmatpush.bf16.msra.mxu0 %v682
        %701 = vmatpush.bf16.msra.mxu0 %v558
        %702 = vmatpush.bf16.msra.mxu0 %v556
        %703 = vmatpush.bf16.msra.mxu0 %v554
        %704 = vmatpush.bf16.msra.mxu0 %v552
        %705 = vmatmul.bf16.gmra.mxu0 %v676
        %v706 = vpop.f32.mrf.mxu0
        %v707 = vadd.f32 %v672, %v706
        %v708 = vpop.f32.mrf.mxu0
        %709 = vdwg.mxu0
        %710 = vrot.lane.b32.xlu0 %v454, 80
        %v711 = vpop.permute.xlu0 %710
        %712 = vrot.lane.b32.xlu0 %v455, 80
        %v713 = vpop.permute.xlu0 %712
        %vm714 = vcmp.lt.s32.totalorder %v461, 80
        %v715 = vsel %vm714, %v711, %v713
        %v716 = vsel %vm714, %v713, %v711
        %v717 = vperm.slane %v465, 1
        %v718 = vperm.slane %v466, 1
        %v719 = vmul.f32 %v715, %v717
        %v720 = vmul.f32 %v716, %v718
        %721 = vrot.lane.b32.xlu0 %v719, 8
        %v722 = vpop.permute.xlu0 %721
        %723 = vrot.lane.b32.xlu0 %v720, 8
        %v724 = vpop.permute.xlu0 %723
        %v725 = vsel %vm475, %v722, %v724
        %v726 = vsel %vm475, %v724, %v722
        %v727 = vmul.f32 %v726, %v480
        %v728 = vmul.f32 %v725, %v481
        %729 = vrot.lane.b32.xlu0 %v727, 1
        %v730 = vpop.permute.xlu0 %729
        %731 = vrot.lane.b32.xlu0 %v728, 1
        %v732 = vpop.permute.xlu0 %731
        %v733 = vsel %vm488, %v730, %v732
        %v734 = vsel %vm488, %v732, %v730
        %v735 = vmul.f32 %v734, %v493
        %v736 = vmul.f32 %v733, %v494
        %737 = vrot.lane.b32.xlu0 %v727, 127
        %v738 = vpop.permute.xlu0 %737
        %739 = vrot.lane.b32.xlu0 %v728, 127
        %v740 = vpop.permute.xlu0 %739
        %v741 = vsel %vm501, %v738, %v740
        %v742 = vsel %vm501, %v740, %v738
        %v743 = vmul.f32 %v741, %v504
        %v744 = vmul.f32 %v742, %v505
        %745 = vrot.lane.b32.xlu0 %v719, 1
        %v746 = vpop.permute.xlu0 %745
        %747 = vrot.lane.b32.xlu0 %v720, 1
        %v748 = vpop.permute.xlu0 %747
        %v749 = vsel %vm488, %v746, %v748
        %v750 = vsel %vm488, %v748, %v746
        %v751 = vmul.f32 %v750, %v493
        %v752 = vmul.f32 %v749, %v494
        %753 = vrot.lane.b32.xlu0 %v719, 127
        %v754 = vpop.permute.xlu0 %753
        %755 = vrot.lane.b32.xlu0 %v720, 127
        %v756 = vpop.permute.xlu0 %755
        %v757 = vsel %vm501, %v754, %v756
        %v758 = vsel %vm501, %v756, %v754
        %v759 = vmul.f32 %v757, %v504
        %v760 = vmul.f32 %v758, %v505
        %761 = vrot.lane.b32.xlu0 %v719, 120
        %v762 = vpop.permute.xlu0 %761
        %763 = vrot.lane.b32.xlu0 %v720, 120
        %v764 = vpop.permute.xlu0 %763
        %v765 = vsel %vm528, %v762, %v764
        %v766 = vsel %vm528, %v764, %v762
        %v767 = vmul.f32 %v765, %v531
        %v768 = vmul.f32 %v766, %v532
        %769 = vrot.lane.b32.xlu0 %v767, 1
        %v770 = vpop.permute.xlu0 %769
        %771 = vrot.lane.b32.xlu0 %v768, 1
        %v772 = vpop.permute.xlu0 %771
        %v773 = vsel %vm488, %v770, %v772
        %v774 = vsel %vm488, %v772, %v770
        %v775 = vmul.f32 %v774, %v493
        %v776 = vmul.f32 %v773, %v494
        %777 = vrot.lane.b32.xlu0 %v767, 127
        %v778 = vpop.permute.xlu0 %777
        %779 = vrot.lane.b32.xlu0 %v768, 127
        %v780 = vpop.permute.xlu0 %779
        %v781 = vsel %vm501, %v778, %v780
        %v782 = vsel %vm501, %v780, %v778
        %v783 = vmul.f32 %v781, %v504
        %v784 = vmul.f32 %v782, %v505
        %v785 = vpack.c.bf16 %v727, %v735
        %v786 = vpack.c.bf16 %v728, %v736
        %v787 = vpack.c.bf16 %v751, %v743
        %v788 = vpack.c.bf16 %v752, %v744
        %v789 = vpack.c.bf16 %v759, %v719
        %v790 = vpack.c.bf16 %v760, %v720
        %v791 = vpack.c.bf16 %v767, %v775
        %v792 = vpack.c.bf16 %v768, %v776
        %v793 = vpack.c.bf16 %v783, %v783
        %v794 = vpack.c.bf16 %v784, %v784
        %s795 = scalar_lea.vmem %s2, 8
        %v796 = vld [vmem:[%s795] sm:$0xf]
        %v798 = vsel %vm638, %v796, 0
        %v801 = vsel %vm642, %v793, 0
        %v804 = vsel %vm642, %v794, 0
        %806 = vmatpush.bf16.msra.mxu0 0
        %807 = vmatpush.bf16.msra.mxu0 0
        %808 = vmatpush.bf16.msra.mxu0 0
        %809 = vmatpush.bf16.msra.mxu0 %v801
        %810 = vmatpush.bf16.msra.mxu0 %v791
        %811 = vmatpush.bf16.msra.mxu0 %v789
        %812 = vmatpush.bf16.msra.mxu0 %v787
        %813 = vmatpush.bf16.msra.mxu0 %v785
        %814 = vmatmul.bf16.gmra.mxu0 %v798
        %v815 = vpop.f32.mrf.mxu0
        %v816 = vadd.f32 0.0, %v815
        %v817 = vpop.f32.mrf.mxu0
        %818 = vdwg.mxu0
        %819 = vmatpush.bf16.msra.mxu0 0
        %820 = vmatpush.bf16.msra.mxu0 0
        %821 = vmatpush.bf16.msra.mxu0 0
        %822 = vmatpush.bf16.msra.mxu0 %v804
        %823 = vmatpush.bf16.msra.mxu0 %v792
        %824 = vmatpush.bf16.msra.mxu0 %v790
        %825 = vmatpush.bf16.msra.mxu0 %v788
        %826 = vmatpush.bf16.msra.mxu0 %v786
        %827 = vmatmul.bf16.gmra.mxu0 %v798
        %v828 = vpop.f32.mrf.mxu0
        %v829 = vadd.f32 0.0, %v828
        %v830 = vpop.f32.mrf.mxu0
        %831 = vdwg.mxu0
        %v832 = vadd.f32 %v694, %v816
        %v833 = vadd.f32 %v707, %v829
        %v834 = vld [vmem:[%s3] sm:$0xff]
        %836 = vset.pattern.permute.xlu0 0
        %837 = vperm.xlu0 %836, %v834
        %v838 = vpop.permute.xlu0 %837
        %v840 = vadd.f32 %v832, %v838
        %v841 = vadd.f32 %v833, %v838
        %v842 = vmul.f32 %v840, %v393
        %v843 = vmul.f32 %v841, %v394
        %v844 = vadd.f32 %v842, %v843
        %845 = vadd.xlane.f32.xlu0 %v844
        %v846 = vpop.xlane.xlu0 %845
        %v847 = vmul.f32 %v846, 0.0052083335
        %v848 = vsub.f32 %v842, %v847
        %v849 = vsub.f32 %v843, %v847
        %v850 = vmul.f32 %v848, %v393
        %v851 = vmul.f32 %v849, %v394
        %v852 = vmul.f32 %v850, %v850
        %v853 = vmul.f32 %v851, %v851
        %v854 = vadd.f32 %v852, %v853
        %855 = vadd.xlane.f32.xlu0 %v854
        %v856 = vpop.xlane.xlu0 %855
        %v857 = vmul.f32 %v856, 0.0052083335
        %v858 = vadd.f32 %v857, 1e-05
        %v859 = vrsqrt.pop %v858
        %v860 = vmul.f32 %v859, %v858
        %v861 = vmul.f32 %v860, %v859
        %v862 = vmul.f32 0.5, %v861
        %v863 = vsub.f32 1.5, %v862
        %v864 = vmul.f32 %v859, %v863
        %vm865 = vweird.f32 %v858
        %vm866 = vweird.f32 %v859
        %vm867 = vmor %vm865, %vm866
        %v868 = vsel %vm867, %v859, %v864
        %v869 = vmul.f32 %v850, %v868
        %v870 = vmul.f32 %v851, %v868
        %v871 = vxor.u32 %v869, 2147483648
        %v872 = vxor.u32 %v870, 2147483648
        %v873 = vmul.f32 %v871, 1.442695
        %v874 = vpow.pop %v873
        %v875 = vmul.f32 %v872, 1.442695
        %v876 = vpow.pop %v875
        %v877 = vadd.f32 %v874, 1.0
        %v878 = vadd.f32 %v876, 1.0
        %v879 = vrcp.pop %v877
        %v880 = vmul.f32 %v877, %v879
        %v881 = vsub.f32 1.0, %v880
        %v882 = vmul.f32 %v879, %v881
        %v883 = vadd.f32 %v879, %v882
        %vm884 = vweird.f32 %v877
        %vm885 = vweird.f32 %v879
        %vm886 = vmor %vm884, %vm885
        %v887 = vsel %vm886, %v879, %v883
        %v888 = vand.u32 2147483647, %v877
        %vm889 = vcmp.eq.f32.partialorder %v888, 8.507059e+37
        %v890 = vand.u32 %v877, 2147483648
        %v891 = vor.u32 1.1754944e-38, %v890
        %v892 = vsel %vm889, %v891, %v887
        %v893 = vmul.f32 1.0, %v892
        %v894 = vrcp.pop %v878
        %v895 = vmul.f32 %v878, %v894
        %v896 = vsub.f32 1.0, %v895
        %v897 = vmul.f32 %v894, %v896
        %v898 = vadd.f32 %v894, %v897
        %vm899 = vweird.f32 %v878
        %vm900 = vweird.f32 %v894
        %vm901 = vmor %vm899, %vm900
        %v902 = vsel %vm901, %v894, %v898
        %v903 = vand.u32 2147483647, %v878
        %vm904 = vcmp.eq.f32.partialorder %v903, 8.507059e+37
        %v905 = vand.u32 %v878, 2147483648
        %v906 = vor.u32 1.1754944e-38, %v905
        %v907 = vsel %vm904, %v906, %v902
        %v908 = vmul.f32 1.0, %v907
        %v909 = vmul.f32 %v869, %v893
        %v910 = vmul.f32 %v870, %v908
        %911 = vrot.lane.b32.xlu0 %v909, 48
        %v912 = vpop.permute.xlu0 %911
        %913 = vrot.lane.b32.xlu0 %v910, 48
        %v914 = vpop.permute.xlu0 %913
        %v915 = vsel %vm462, %v912, %v914
        %v916 = vsel %vm462, %v914, %v912
        %v917 = vmul.f32 %v916, %v467
        %v918 = vmul.f32 %v915, %v468
        %919 = vrot.lane.b32.xlu0 %v917, 8
        %v920 = vpop.permute.xlu0 %919
        %921 = vrot.lane.b32.xlu0 %v918, 8
        %v922 = vpop.permute.xlu0 %921
        %v923 = vsel %vm475, %v920, %v922
        %v924 = vsel %vm475, %v922, %v920
        %v925 = vmul.f32 %v924, %v480
        %v926 = vmul.f32 %v923, %v481
        %927 = vrot.lane.b32.xlu0 %v925, 1
        %v928 = vpop.permute.xlu0 %927
        %929 = vrot.lane.b32.xlu0 %v926, 1
        %v930 = vpop.permute.xlu0 %929
        %v931 = vsel %vm488, %v928, %v930
        %v932 = vsel %vm488, %v930, %v928
        %v933 = vmul.f32 %v932, %v493
        %v934 = vmul.f32 %v931, %v494
        %935 = vrot.lane.b32.xlu0 %v925, 127
        %v936 = vpop.permute.xlu0 %935
        %937 = vrot.lane.b32.xlu0 %v926, 127
        %v938 = vpop.permute.xlu0 %937
        %v939 = vsel %vm501, %v936, %v938
        %v940 = vsel %vm501, %v938, %v936
        %v941 = vmul.f32 %v939, %v504
        %v942 = vmul.f32 %v940, %v505
        %943 = vrot.lane.b32.xlu0 %v917, 1
        %v944 = vpop.permute.xlu0 %943
        %945 = vrot.lane.b32.xlu0 %v918, 1
        %v946 = vpop.permute.xlu0 %945
        %v947 = vsel %vm488, %v944, %v946
        %v948 = vsel %vm488, %v946, %v944
        %v949 = vmul.f32 %v948, %v493
        %v950 = vmul.f32 %v947, %v494
        %951 = vrot.lane.b32.xlu0 %v917, 127
        %v952 = vpop.permute.xlu0 %951
        %953 = vrot.lane.b32.xlu0 %v918, 127
        %v954 = vpop.permute.xlu0 %953
        %v955 = vsel %vm501, %v952, %v954
        %v956 = vsel %vm501, %v954, %v952
        %v957 = vmul.f32 %v955, %v504
        %v958 = vmul.f32 %v956, %v505
        %959 = vrot.lane.b32.xlu0 %v917, 120
        %v960 = vpop.permute.xlu0 %959
        %961 = vrot.lane.b32.xlu0 %v918, 120
        %v962 = vpop.permute.xlu0 %961
        %v963 = vsel %vm528, %v960, %v962
        %v964 = vsel %vm528, %v962, %v960
        %v965 = vmul.f32 %v963, %v531
        %v966 = vmul.f32 %v964, %v532
        %967 = vrot.lane.b32.xlu0 %v965, 1
        %v968 = vpop.permute.xlu0 %967
        %969 = vrot.lane.b32.xlu0 %v966, 1
        %v970 = vpop.permute.xlu0 %969
        %v971 = vsel %vm488, %v968, %v970
        %v972 = vsel %vm488, %v970, %v968
        %v973 = vmul.f32 %v972, %v493
        %v974 = vmul.f32 %v971, %v494
        %975 = vrot.lane.b32.xlu0 %v965, 127
        %v976 = vpop.permute.xlu0 %975
        %977 = vrot.lane.b32.xlu0 %v966, 127
        %v978 = vpop.permute.xlu0 %977
        %v979 = vsel %vm501, %v976, %v978
        %v980 = vsel %vm501, %v978, %v976
        %v981 = vmul.f32 %v979, %v504
        %v982 = vmul.f32 %v980, %v505
        %v983 = vpack.c.bf16 %v925, %v933
        %v984 = vpack.c.bf16 %v926, %v934
        %v985 = vpack.c.bf16 %v949, %v941
        %v986 = vpack.c.bf16 %v950, %v942
        %v987 = vpack.c.bf16 %v957, %v917
        %v988 = vpack.c.bf16 %v958, %v918
        %v989 = vpack.c.bf16 %v965, %v973
        %v990 = vpack.c.bf16 %v966, %v974
        %v991 = vpack.c.bf16 %v981, %v981
        %v992 = vpack.c.bf16 %v982, %v982
        %v993 = vld [vmem:[%s4] sm:$0xf]
        %994 = vrot.lane.b32.xlu0 %v909, 8
        %v995 = vpop.permute.xlu0 %994
        %996 = vrot.lane.b32.xlu0 %v910, 8
        %v997 = vpop.permute.xlu0 %996
        %v998 = vsel %vm475, %v995, %v997
        %v999 = vsel %vm475, %v997, %v995
        %v1000 = vmul.f32 %v999, %v480
        %v1001 = vmul.f32 %v998, %v481
        %1002 = vrot.lane.b32.xlu0 %v1000, 1
        %v1003 = vpop.permute.xlu0 %1002
        %1004 = vrot.lane.b32.xlu0 %v1001, 1
        %v1005 = vpop.permute.xlu0 %1004
        %v1006 = vsel %vm488, %v1003, %v1005
        %v1007 = vsel %vm488, %v1005, %v1003
        %v1008 = vmul.f32 %v1007, %v493
        %v1009 = vmul.f32 %v1006, %v494
        %1010 = vrot.lane.b32.xlu0 %v1000, 127
        %v1011 = vpop.permute.xlu0 %1010
        %1012 = vrot.lane.b32.xlu0 %v1001, 127
        %v1013 = vpop.permute.xlu0 %1012
        %v1014 = vsel %vm501, %v1011, %v1013
        %v1015 = vsel %vm501, %v1013, %v1011
        %v1016 = vmul.f32 %v1014, %v504
        %v1017 = vmul.f32 %v1015, %v505
        %1018 = vrot.lane.b32.xlu0 %v909, 1
        %v1019 = vpop.permute.xlu0 %1018
        %1020 = vrot.lane.b32.xlu0 %v910, 1
        %v1021 = vpop.permute.xlu0 %1020
        %v1022 = vsel %vm488, %v1019, %v1021
        %v1023 = vsel %vm488, %v1021, %v1019
        %v1024 = vmul.f32 %v1023, %v493
        %v1025 = vmul.f32 %v1022, %v494
        %1026 = vrot.lane.b32.xlu0 %v909, 127
        %v1027 = vpop.permute.xlu0 %1026
        %1028 = vrot.lane.b32.xlu0 %v910, 127
        %v1029 = vpop.permute.xlu0 %1028
        %v1030 = vsel %vm501, %v1027, %v1029
        %v1031 = vsel %vm501, %v1029, %v1027
        %v1032 = vmul.f32 %v1030, %v504
        %v1033 = vmul.f32 %v1031, %v505
        %1034 = vrot.lane.b32.xlu0 %v909, 120
        %v1035 = vpop.permute.xlu0 %1034
        %1036 = vrot.lane.b32.xlu0 %v910, 120
        %v1037 = vpop.permute.xlu0 %1036
        %v1038 = vsel %vm528, %v1035, %v1037
        %v1039 = vsel %vm528, %v1037, %v1035
        %v1040 = vmul.f32 %v1038, %v531
        %v1041 = vmul.f32 %v1039, %v532
        %1042 = vrot.lane.b32.xlu0 %v1040, 1
        %v1043 = vpop.permute.xlu0 %1042
        %1044 = vrot.lane.b32.xlu0 %v1041, 1
        %v1045 = vpop.permute.xlu0 %1044
        %v1046 = vsel %vm488, %v1043, %v1045
        %v1047 = vsel %vm488, %v1045, %v1043
        %v1048 = vmul.f32 %v1047, %v493
        %v1049 = vmul.f32 %v1046, %v494
        %1050 = vrot.lane.b32.xlu0 %v1040, 127
        %v1051 = vpop.permute.xlu0 %1050
        %1052 = vrot.lane.b32.xlu0 %v1041, 127
        %v1053 = vpop.permute.xlu0 %1052
        %v1054 = vsel %vm501, %v1051, %v1053
        %v1055 = vsel %vm501, %v1053, %v1051
        %v1056 = vmul.f32 %v1054, %v504
        %v1057 = vmul.f32 %v1055, %v505
        %v1058 = vpack.c.bf16 %v1000, %v1008
        %v1059 = vpack.c.bf16 %v1001, %v1009
        %v1060 = vpack.c.bf16 %v1024, %v1016
        %v1061 = vpack.c.bf16 %v1025, %v1017
        %v1062 = vpack.c.bf16 %v1032, %v909
        %v1063 = vpack.c.bf16 %v1033, %v910
        %v1064 = vpack.c.bf16 %v1040, %v1048
        %v1065 = vpack.c.bf16 %v1041, %v1049
        %v1066 = vpack.c.bf16 %v1056, %v1056
        %v1067 = vpack.c.bf16 %v1057, %v1057
        %s1068 = scalar_lea.vmem %s4, 4
        %v1069 = vld [vmem:[%s1068] sm:$0xf]
        %v1071 = vsel %vm638, %v1069, 0
        %v1074 = vsel %vm642, %v1066, 0
        %v1077 = vsel %vm642, %v1067, 0
        %1079 = vmatpush.bf16.msra.mxu0 0
        %1080 = vmatpush.bf16.msra.mxu0 0
        %1081 = vmatpush.bf16.msra.mxu0 0
        %1082 = vmatpush.bf16.msra.mxu0 %v1074
        %1083 = vmatpush.bf16.msra.mxu0 %v1064
        %1084 = vmatpush.bf16.msra.mxu0 %v1062
        %1085 = vmatpush.bf16.msra.mxu0 %v1060
        %1086 = vmatpush.bf16.msra.mxu0 %v1058
        %1087 = vmatmul.bf16.gmra.mxu0 %v1071
        %v1088 = vpop.f32.mrf.mxu0
        %v1089 = vadd.f32 0.0, %v1088
        %v1090 = vpop.f32.mrf.mxu0
        %1091 = vdwg.mxu0
        %1092 = vmatpush.bf16.msra.mxu0 0
        %1093 = vmatpush.bf16.msra.mxu0 0
        %1094 = vmatpush.bf16.msra.mxu0 0
        %1095 = vmatpush.bf16.msra.mxu0 %v1077
        %1096 = vmatpush.bf16.msra.mxu0 %v1065
        %1097 = vmatpush.bf16.msra.mxu0 %v1063
        %1098 = vmatpush.bf16.msra.mxu0 %v1061
        %1099 = vmatpush.bf16.msra.mxu0 %v1059
        %1100 = vmatmul.bf16.gmra.mxu0 %v1071
        %v1101 = vpop.f32.mrf.mxu0
        %v1102 = vadd.f32 0.0, %v1101
        %v1103 = vpop.f32.mrf.mxu0
        %1104 = vdwg.mxu0
        %v1106 = vsel %vm638, %v993, 0
        %v1109 = vsel %vm642, %v991, 0
        %v1112 = vsel %vm642, %v992, 0
        %1114 = vmatpush.bf16.msra.mxu0 0
        %1115 = vmatpush.bf16.msra.mxu0 0
        %1116 = vmatpush.bf16.msra.mxu0 0
        %1117 = vmatpush.bf16.msra.mxu0 %v1109
        %1118 = vmatpush.bf16.msra.mxu0 %v989
        %1119 = vmatpush.bf16.msra.mxu0 %v987
        %1120 = vmatpush.bf16.msra.mxu0 %v985
        %1121 = vmatpush.bf16.msra.mxu0 %v983
        %1122 = vmatmul.bf16.gmra.mxu0 %v1106
        %v1123 = vpop.f32.mrf.mxu0
        %v1124 = vadd.f32 %v1089, %v1123
        %v1125 = vpop.f32.mrf.mxu0
        %1126 = vdwg.mxu0
        %1127 = vmatpush.bf16.msra.mxu0 0
        %1128 = vmatpush.bf16.msra.mxu0 0
        %1129 = vmatpush.bf16.msra.mxu0 0
        %1130 = vmatpush.bf16.msra.mxu0 %v1112
        %1131 = vmatpush.bf16.msra.mxu0 %v990
        %1132 = vmatpush.bf16.msra.mxu0 %v988
        %1133 = vmatpush.bf16.msra.mxu0 %v986
        %1134 = vmatpush.bf16.msra.mxu0 %v984
        %1135 = vmatmul.bf16.gmra.mxu0 %v1106
        %v1136 = vpop.f32.mrf.mxu0
        %v1137 = vadd.f32 %v1102, %v1136
        %v1138 = vpop.f32.mrf.mxu0
        %1139 = vdwg.mxu0
        %1140 = vrot.lane.b32.xlu0 %v909, 80
        %v1141 = vpop.permute.xlu0 %1140
        %1142 = vrot.lane.b32.xlu0 %v910, 80
        %v1143 = vpop.permute.xlu0 %1142
        %v1144 = vsel %vm714, %v1141, %v1143
        %v1145 = vsel %vm714, %v1143, %v1141
        %v1146 = vmul.f32 %v1144, %v717
        %v1147 = vmul.f32 %v1145, %v718
        %1148 = vrot.lane.b32.xlu0 %v1146, 8
        %v1149 = vpop.permute.xlu0 %1148
        %1150 = vrot.lane.b32.xlu0 %v1147, 8
        %v1151 = vpop.permute.xlu0 %1150
        %v1152 = vsel %vm475, %v1149, %v1151
        %v1153 = vsel %vm475, %v1151, %v1149
        %v1154 = vmul.f32 %v1153, %v480
        %v1155 = vmul.f32 %v1152, %v481
        %1156 = vrot.lane.b32.xlu0 %v1154, 1
        %v1157 = vpop.permute.xlu0 %1156
        %1158 = vrot.lane.b32.xlu0 %v1155, 1
        %v1159 = vpop.permute.xlu0 %1158
        %v1160 = vsel %vm488, %v1157, %v1159
        %v1161 = vsel %vm488, %v1159, %v1157
        %v1162 = vmul.f32 %v1161, %v493
        %v1163 = vmul.f32 %v1160, %v494
        %1164 = vrot.lane.b32.xlu0 %v1154, 127
        %v1165 = vpop.permute.xlu0 %1164
        %1166 = vrot.lane.b32.xlu0 %v1155, 127
        %v1167 = vpop.permute.xlu0 %1166
        %v1168 = vsel %vm501, %v1165, %v1167
        %v1169 = vsel %vm501, %v1167, %v1165
        %v1170 = vmul.f32 %v1168, %v504
        %v1171 = vmul.f32 %v1169, %v505
        %1172 = vrot.lane.b32.xlu0 %v1146, 1
        %v1173 = vpop.permute.xlu0 %1172
        %1174 = vrot.lane.b32.xlu0 %v1147, 1
        %v1175 = vpop.permute.xlu0 %1174
        %v1176 = vsel %vm488, %v1173, %v1175
        %v1177 = vsel %vm488, %v1175, %v1173
        %v1178 = vmul.f32 %v1177, %v493
        %v1179 = vmul.f32 %v1176, %v494
        %1180 = vrot.lane.b32.xlu0 %v1146, 127
        %v1181 = vpop.permute.xlu0 %1180
        %1182 = vrot.lane.b32.xlu0 %v1147, 127
        %v1183 = vpop.permute.xlu0 %1182
        %v1184 = vsel %vm501, %v1181, %v1183
        %v1185 = vsel %vm501, %v1183, %v1181
        %v1186 = vmul.f32 %v1184, %v504
        %v1187 = vmul.f32 %v1185, %v505
        %1188 = vrot.lane.b32.xlu0 %v1146, 120
        %v1189 = vpop.permute.xlu0 %1188
        %1190 = vrot.lane.b32.xlu0 %v1147, 120
        %v1191 = vpop.permute.xlu0 %1190
        %v1192 = vsel %vm528, %v1189, %v1191
        %v1193 = vsel %vm528, %v1191, %v1189
        %v1194 = vmul.f32 %v1192, %v531
        %v1195 = vmul.f32 %v1193, %v532
        %1196 = vrot.lane.b32.xlu0 %v1194, 1
        %v1197 = vpop.permute.xlu0 %1196
        %1198 = vrot.lane.b32.xlu0 %v1195, 1
        %v1199 = vpop.permute.xlu0 %1198
        %v1200 = vsel %vm488, %v1197, %v1199
        %v1201 = vsel %vm488, %v1199, %v1197
        %v1202 = vmul.f32 %v1201, %v493
        %v1203 = vmul.f32 %v1200, %v494
        %1204 = vrot.lane.b32.xlu0 %v1194, 127
        %v1205 = vpop.permute.xlu0 %1204
        %1206 = vrot.lane.b32.xlu0 %v1195, 127
        %v1207 = vpop.permute.xlu0 %1206
        %v1208 = vsel %vm501, %v1205, %v1207
        %v1209 = vsel %vm501, %v1207, %v1205
        %v1210 = vmul.f32 %v1208, %v504
        %v1211 = vmul.f32 %v1209, %v505
        %v1212 = vpack.c.bf16 %v1154, %v1162
        %v1213 = vpack.c.bf16 %v1155, %v1163
        %v1214 = vpack.c.bf16 %v1178, %v1170
        %v1215 = vpack.c.bf16 %v1179, %v1171
        %v1216 = vpack.c.bf16 %v1186, %v1146
        %v1217 = vpack.c.bf16 %v1187, %v1147
        %v1218 = vpack.c.bf16 %v1194, %v1202
        %v1219 = vpack.c.bf16 %v1195, %v1203
        %v1220 = vpack.c.bf16 %v1210, %v1210
        %v1221 = vpack.c.bf16 %v1211, %v1211
        %s1222 = scalar_lea.vmem %s4, 8
        %v1223 = vld [vmem:[%s1222] sm:$0xf]
        %v1225 = vsel %vm638, %v1223, 0
        %v1228 = vsel %vm642, %v1220, 0
        %v1231 = vsel %vm642, %v1221, 0
        %1233 = vmatpush.bf16.msra.mxu0 0
        %1234 = vmatpush.bf16.msra.mxu0 0
        %1235 = vmatpush.bf16.msra.mxu0 0
        %1236 = vmatpush.bf16.msra.mxu0 %v1228
        %1237 = vmatpush.bf16.msra.mxu0 %v1218
        %1238 = vmatpush.bf16.msra.mxu0 %v1216
        %1239 = vmatpush.bf16.msra.mxu0 %v1214
        %1240 = vmatpush.bf16.msra.mxu0 %v1212
        %1241 = vmatmul.bf16.gmra.mxu0 %v1225
        %v1242 = vpop.f32.mrf.mxu0
        %v1243 = vadd.f32 0.0, %v1242
        %v1244 = vpop.f32.mrf.mxu0
        %1245 = vdwg.mxu0
        %1246 = vmatpush.bf16.msra.mxu0 0
        %1247 = vmatpush.bf16.msra.mxu0 0
        %1248 = vmatpush.bf16.msra.mxu0 0
        %1249 = vmatpush.bf16.msra.mxu0 %v1231
        %1250 = vmatpush.bf16.msra.mxu0 %v1219
        %1251 = vmatpush.bf16.msra.mxu0 %v1217
        %1252 = vmatpush.bf16.msra.mxu0 %v1215
        %1253 = vmatpush.bf16.msra.mxu0 %v1213
        %1254 = vmatmul.bf16.gmra.mxu0 %v1225
        %v1255 = vpop.f32.mrf.mxu0
        %v1256 = vadd.f32 0.0, %v1255
        %v1257 = vpop.f32.mrf.mxu0
        %1258 = vdwg.mxu0
        %v1259 = vadd.f32 %v1124, %v1243
        %v1260 = vadd.f32 %v1137, %v1256
        %v1261 = vld [vmem:[%s5] sm:$0xff]
        %1263 = vset.pattern.permute.xlu0 0
        %1264 = vperm.xlu0 %1263, %v1261
        %v1265 = vpop.permute.xlu0 %1264
        %v1267 = vadd.f32 %v1259, %v1265
        %v1268 = vadd.f32 %v1260, %v1265
        %v1269 = vmul.f32 %v1267, %v393
        %v1270 = vmul.f32 %v1268, %v394
        %v1271 = vadd.f32 %v1269, %v1270
        %1272 = vadd.xlane.f32.xlu0 %v1271
        %v1273 = vpop.xlane.xlu0 %1272
        %v1274 = vmul.f32 %v1273, 0.0052083335
        %v1275 = vld [vmem:[%s6] sm:$0xff]
        %v1276 = vmul.f32 %v1275, %v1274
        %vm1277 = vcmask 15360
        %v1278 = vsel %vm1277, %v1276, 0.0
        %v1279 = vrot.slane %v1278, 4
        %v1280 = vadd.f32 %v1278, %v1279
        %v1281 = vrot.slane %v1280, 2
        %v1282 = vadd.f32 %v1280, %v1281
        %v1283 = vrot.slane %v1282, 1
        %v1284 = vadd.f32 %v1282, %v1283
        %v1285 = vld [vmem:[%s7] sm:$0x1]
        %v1286 = vadd.f32 %v1284, %v1285
        %v1287 = vmax.f32 %v1286, 0.0
        %v1288 = vld [vmem:[%s8] sm:$0xff]
        %v1289 = vperm.slane %v1287, 0
        %v1290 = vmul.f32 %v1288, %v1289
        %v1291 = vsel %vm1277, %v1290, 0.0
        %1292 = vadd.xlane.f32.xlu0 %v1291
        %v1293 = vpop.xlane.xlu0 %1292
        %v1294 = vld [vmem:[%s9] sm:$0xff]
        %v1295 = vadd.f32 %v1293, %v1294
        %v1296 = vxor.u32 %v1295, 2147483648
        %v1297 = vmul.f32 %v1296, 1.442695
        %v1298 = vpow.pop %v1297
        %v1299 = vadd.f32 %v1298, 1.0
        %v1300 = vrcp.pop %v1299
        %v1301 = vmul.f32 %v1299, %v1300
        %v1302 = vsub.f32 1.0, %v1301
        %v1303 = vmul.f32 %v1300, %v1302
        %v1304 = vadd.f32 %v1300, %v1303
        %vm1305 = vweird.f32 %v1299
        %vm1306 = vweird.f32 %v1300
        %vm1307 = vmor %vm1305, %vm1306
        %v1308 = vsel %vm1307, %v1300, %v1304
        %v1309 = vand.u32 2147483647, %v1299
        %vm1310 = vcmp.eq.f32.partialorder %v1309, 8.507059e+37
        %v1311 = vand.u32 %v1299, 2147483648
        %v1312 = vor.u32 1.1754944e-38, %v1311
        %v1313 = vsel %vm1310, %v1312, %v1308
        %v1314 = vmul.f32 1.0, %v1313
        %1316 = vset.pattern.permute.xlu0 0
        %1317 = vperm.xlu0 %1316, %v1314
        %v1318 = vpop.permute.xlu0 %1317
        %v1320 = vmul.f32 %v1269, %v1318
        %v1321 = vmul.f32 %v1270, %v1318
        %v1322 = vadd.f32 %v1320, %v383
        %v1323 = vadd.f32 %v1321, %v384
        %1324 = vst [vmem:[%s377] sm:$0xff] %v1322
        %1325 = vst [vmem:[%s377 + $0x8] sm:$0xff] %v1323
        %s1326 = sand.u32 %s250, 1
        %s1327 = scalar_lea.sflag [#allocation4], %s1326
        %s1328 = sand.u32 %s250, 1
        %s1329 = smul.addr %s1328, 16
        %s1330 = scalar_lea.vmem [#allocation5], %s1329
        // Predicated region
        $region65: #{tpu_custom_call.1} parent=59 // pred_check
          %p1331 = pneg %p260
        $region66: #{tpu_custom_call.1} parent=59 // pred_check_branch
          %1333 = sbr.rel (%p1331) target = $region68
        $region67: #{tpu_custom_call.1} parent=59 // pred_region
          %1335 = vsyncadd %s1327, 0
          %s1336 = smul.addr %s27, 2
          %s1337 = smul.addr %s1336, 8
          %s1338 = scalar_lea.hbm %s10, %s1337
          %s1340 = sshll.u32 %s1330, 4
          %s1341 = int_to_ptr.vmem [resolvable:$true] %s1340
          %s1342 = sshll.u32 %s1338, 4
          %s1343 = int_to_ptr.hbm [resolvable:$true] %s1342
          %1345 = dma.vmem_to_hbm [thread:$0]  %s1341, 256, %s1343, %s1327
        $region68: #{tpu_custom_call.1} parent=59 // pred_fallthru
          _
      $region60: #{tpu_custom_call.1} parent=5 // pred_fallthru
        _
      %p1346 = scmp.le.s32.totalorder 2, %s22
      // Predicated region
      $region69: #{tpu_custom_call.1} parent=5 // pred_check
        %p1347 = pneg %p1346
      $region70: #{tpu_custom_call.1} parent=5 // pred_check_branch
        %1349 = sbr.rel (%p1347) target = $region72
      $region71: #{tpu_custom_call.1} parent=5 // pred_region
        %s1350 = ssub.s32 %s22, 2
        // Predicated region
        $region73: #{tpu_custom_call.1} parent=71 // pred_check
          %p1351 = pneg %p266
        $region74: #{tpu_custom_call.1} parent=71 // pred_check_branch
          %1353 = sbr.rel (%p1351) target = $region76
        $region75: #{tpu_custom_call.1} parent=71 // pred_region
          %s1354 = sand.u32 %s251, 1
          %s1355 = scalar_lea.sflag [#allocation4], %s1354
          %s1356 = sand.u32 %s251, 1
          %s1357 = smul.addr %s1356, 16
          %s1358 = scalar_lea.vmem [#allocation5], %s1357
          %1360 = dma.done %s1355, 256
        $region76: #{tpu_custom_call.1} parent=71 // pred_fallthru
          _
      $region72: #{tpu_custom_call.1} parent=5 // pred_fallthru
        _
    $region6: #{tpu_custom_call.1} parent=1 // loop_footer
      %s26 = sadd.s32 1, %s22
    $region7: #{tpu_custom_call.1} parent=1 // loop_footer_branch
      %21 = sbr.rel target = $region3
    $region8: #{tpu_custom_call.1} parent=1 // loop_exit
      _
    %1361 = vsyncpa [#allocation3], 1
    %s1362 = scalar_lea.sflag [#allocation3], 1
    %1363 = vsyncpa %s1362, 1
    %1364 = vsyncpa [#allocation4], 1
    %s1365 = scalar_lea.sflag [#allocation4], 1
    %1366 = vsyncpa %s1365, 1

</llo_original>
